<compile_context>
chip_gen: v6e
topology: v6e:2x2x1
jax: 0.10.0
libtpu: 0.0.40
codegen_flags: <defaults>
</compile_context>

<pallas_src>
import functools

import jax
import jax.numpy as jnp
from jax.experimental import pallas as pl
from jax.experimental.pallas import tpu as pltpu

KPAD = 128  # padded im2col contraction dim (9 taps * 9 channels = 81 -> 128)


def _round_up(x, m):
    return ((x + m - 1) // m) * m


# ----------------------------------------------------------------------------
# Fused kernel: 3 backbone branches (one block-diag matmul) + trip-mean + head.
#   grid = (batch blocks [parallel], HW tiles [arbitrary])
#   per step  : loop over sub_hw pixel chunks:
#                 y = relu(P @ W_blockdiag + b)          (M, 3*Fpad) f32
#                 acc(bt, Fpad) += sum over branches + pixels of y
#   last step : out = ((acc / (3*HW)).bf16) @ Wc + bc
# ----------------------------------------------------------------------------
def _fused_kernel(p_ref, w_ref, b_ref, wc_ref, bc_ref, o_ref, acc_ref,
                  *, n_sub, sub_hw, fpad, inv_total):
    t = pl.program_id(1)

    @pl.when(t == 0)
    def _():
        acc_ref[...] = jnp.zeros_like(acc_ref)

    w = w_ref[...]            # (Kpad, 3*Fpad) bf16, resident across the grid
    bias = b_ref[...]         # (1, 3*Fpad)   f32
    bt = p_ref.shape[0]

    def body(s, carry):
        start = pl.multiple_of(s * sub_hw, sub_hw)
        p = p_ref[:, pl.ds(start, sub_hw), :]                  # (bt, sub_hw, Kpad) bf16
        p2d = p.reshape(bt * sub_hw, p.shape[-1])              # tall 2-D MXU matmul
        y = jnp.dot(p2d, w, preferred_element_type=jnp.float32)  # (M, 3*Fpad) f32
        y = jnp.maximum(y + bias, 0.0)                         # bias + ReLU per pixel
        # sum the 3 branch chunks (lane-aligned slices, Fpad % 128 == 0)
        ysum = y[:, :fpad] + y[:, fpad:2 * fpad] + y[:, 2 * fpad:3 * fpad]
        # per-batch-row spatial partial sum into the resident accumulator
        acc_ref[...] += ysum.reshape(bt, sub_hw, fpad).sum(axis=1)
        return carry

    jax.lax.fori_loop(0, n_sub, body, 0, unroll=True)

    @pl.when(t == pl.num_programs(1) - 1)
    def _():
        favg = (acc_ref[...] * inv_total).astype(jnp.bfloat16)  # mean over 3*HW
        o_ref[...] = (
            jnp.dot(favg, wc_ref[...], preferred_element_type=jnp.float32)
            + bc_ref[...]
        )


def _fused_forward(patches, w, b, wc, bc, *, tile_hw, sub_hw):
    B, HW, Kpad = patches.shape
    F3 = w.shape[-1]
    Fpad = F3 // 3
    Cpad = wc.shape[-1]
    n_hw = HW // tile_hw
    n_sub = tile_hw // sub_hw

    # Batch split for v7x megacore; keep output block (8,128)-friendly
    # (leading block dim either a multiple of 8 or the full batch).
    if B % 2 == 0 and (B // 2) % 8 == 0:
        bt = B // 2
    else:
        bt = B
    nb = B // bt

    kernel = functools.partial(
        _fused_kernel, n_sub=n_sub, sub_hw=sub_hw, fpad=Fpad,
        inv_total=1.0 / (3.0 * HW))

    # VMEM budget: double-buffered patch block + resident weights/bias/head +
    # accumulator + f32 matmul chunk + output block; capped for v7x (64 MiB).
    vmem_bytes = int(
        2 * bt * tile_hw * Kpad * 2          # patch block, bf16, double-buffered
        + Kpad * F3 * 2 + F3 * 4             # block-diag weight (bf16) + bias (f32)
        + Fpad * Cpad * 2 + Cpad * 4         # head weight (bf16) + bias (f32)
        + bt * Fpad * 4                      # accumulator
        + bt * sub_hw * F3 * 4               # f32 matmul chunk
        + 2 * bt * Cpad * 4)                 # output block
    vmem_limit = min(max(2 * vmem_bytes, 16 * 1024 * 1024), 48 * 1024 * 1024)

    return pl.pallas_call(
        kernel,
        out_shape=jax.ShapeDtypeStruct((B, Cpad), jnp.float32),
        grid=(nb, n_hw),
        in_specs=[
            pl.BlockSpec((bt, tile_hw, Kpad), lambda bi, t: (bi, t, 0)),
            pl.BlockSpec((Kpad, F3), lambda bi, t: (0, 0)),
            pl.BlockSpec((1, F3), lambda bi, t: (0, 0)),
            pl.BlockSpec((Fpad, Cpad), lambda bi, t: (0, 0)),
            pl.BlockSpec((1, Cpad), lambda bi, t: (0, 0)),
        ],
        out_specs=pl.BlockSpec((bt, Cpad), lambda bi, t: (bi, 0)),
        scratch_shapes=[pltpu.VMEM((bt, Fpad), jnp.float32)],
        compiler_params=pltpu.CompilerParams(
            dimension_semantics=("parallel", "arbitrary"),
            vmem_limit_bytes=vmem_limit,
        ),
    )(patches, w, b, wc, bc)


# ----------------------------------------------------------------------------
# Glue: im2col for a 3x3 / stride-1 / pad-1 conv over ALL 9 input channels.
# K ordering is (dh, dw, channel 0..8), matching the block-diagonal weight.
# Done in bf16 so no full-size f32 patch intermediate hits HBM.
# ----------------------------------------------------------------------------
def im2col_3x3_allch(x_nhwc):
    B, H, W, C = x_nhwc.shape
    xp = jnp.pad(x_nhwc, ((0, 0), (1, 1), (1, 1), (0, 0)))
    cols = []
    for dh in range(3):
        for dw in range(3):
            cols.append(xp[:, dh:dh + H, dw:dw + W, :])
    p = jnp.concatenate(cols, axis=-1)          # (B, H, W, 9*C)
    return p.reshape(B, H * W, 9 * C)


# ----------------------------------------------------------------------------
# Full module forward
# ----------------------------------------------------------------------------
@functools.partial(jax.jit,
                   static_argnames=("num_classes", "tile_hw", "sub_hw"))
def googlenet_trip_mean_forward(x_nchw, params, *, num_classes,
                                tile_hw=512, sub_hw=128):
    # x_nchw: (B, 9, H, W) float32, matching the PyTorch NCHW convention.
    B, Cin, H, W = x_nchw.shape
    assert Cin == 9
    HW = H * W
    tile_hw = min(tile_hw, HW)
    sub_hw = min(sub_hw, tile_hw)
    assert HW % tile_hw == 0 and tile_hw % sub_hw == 0
    assert tile_hw % 16 == 0 and sub_hw % 16 == 0   # bf16 sublane packing

    x_nhwc = jnp.transpose(x_nchw, (0, 2, 3, 1)).astype(jnp.bfloat16)
    patches = im2col_3x3_allch(x_nhwc)               # (B, HW, 81) bf16
    patches = jnp.pad(
        patches, ((0, 0), (0, 0), (0, KPAD - patches.shape[-1])))

    out = _fused_forward(patches, params["w"], params["b"],
                         params["wc"], params["bc"],
                         tile_hw=tile_hw, sub_hw=sub_hw)
    return out[:, :num_classes]


def make_params(key, num_ftrs, num_classes):
    """Returns (kernel-packed params, raw params for the pure-JAX reference)."""
    Fpad = _round_up(num_ftrs, 128)
    Cpad = _round_up(num_classes, 128)
    keys = jax.random.split(key, 8)

    w_raw, b_raw = [], []
    for i in range(3):
        # PyTorch conv weight (F, Cin=3, 3, 3) -> (kh, kw, cin, F) -> (27, F)
        w_pt = jax.random.normal(keys[2 * i], (num_ftrs, 3, 3, 3),
                                 jnp.float32) * 0.1
        w = jnp.transpose(w_pt, (2, 3, 1, 0)).reshape(27, num_ftrs)
        w = w.astype(jnp.bfloat16).astype(jnp.float32)   # round like the kernel
        w_raw.append(w)
        b = jax.random.normal(keys[2 * i + 1], (1, num_ftrs), jnp.float32) * 0.1
        b_raw.append(b)

    # Block-diagonal branch-concat weight: rows ordered (tap, channel 0..8),
    # branch i occupies channels 3i..3i+3 and output columns [i*Fpad, i*Fpad+F).
    w_big = jnp.zeros((KPAD, 3 * Fpad), jnp.float32)
    for i in range(3):
        wi = w_raw[i].reshape(9, 3, num_ftrs)            # (tap, cin_local, F)
        for tap in range(9):
            r0 = tap * 9 + 3 * i
            w_big = w_big.at[r0:r0 + 3,
                             i * Fpad:i * Fpad + num_ftrs].set(wi[tap])
    b_big = jnp.zeros((1, 3 * Fpad), jnp.float32)
    for i in range(3):
        b_big = b_big.at[:, i * Fpad:i * Fpad + num_ftrs].set(b_raw[i])

    # Classifier: PyTorch Linear weight (C, F) -> transposed, bf16-rounded, padded.
    wc_pt = jax.random.normal(keys[6], (num_classes, num_ftrs), jnp.float32) * 0.1
    wc = wc_pt.T.astype(jnp.bfloat16).astype(jnp.float32)      # (F, C)
    bc = jax.random.normal(keys[7], (1, num_classes), jnp.float32) * 0.1
    wc_pad = jnp.pad(wc, ((0, Fpad - num_ftrs), (0, Cpad - num_classes)))
    bc_pad = jnp.pad(bc, ((0, 0), (0, Cpad - num_classes)))

    params = {
        "w": w_big.astype(jnp.bfloat16),     # (KPAD, 3*Fpad) bf16 block-diag
        "b": b_big,                          # (1, 3*Fpad)    f32
        "wc": wc_pad.astype(jnp.bfloat16),   # (Fpad, Cpad)   bf16
        "bc": bc_pad,                        # (1, Cpad)      f32
    }
    raw = {"w": jnp.stack(w_raw), "b": jnp.stack(b_raw), "wc": wc, "bc": bc}
    return params, raw


# ----------------------------------------------------------------------------
# Pure-JAX reference (same bf16-rounded inputs/weights, f32 accumulation).
# ----------------------------------------------------------------------------
def reference_forward(x_nchw, raw, num_ftrs, num_classes):
    hi = jax.lax.Precision.HIGHEST
    x_nhwc = (jnp.transpose(x_nchw, (0, 2, 3, 1))
              .astype(jnp.bfloat16).astype(jnp.float32))
    B, H, W, _ = x_nhwc.shape
    HW = H * W
    feat_sum = 0.0
    for i in range(3):
        xi = x_nhwc[..., 3 * i:3 * (i + 1)]
        xp = jnp.pad(xi, ((0, 0), (1, 1), (1, 1), (0, 0)))
        cols = [xp[:, dh:dh + H, dw:dw + W, :]
                for dh in range(3) for dw in range(3)]
        p = jnp.concatenate(cols, axis=-1).reshape(B, HW, 27)
        y = jnp.maximum(
            jnp.einsum("bpk,kf->bpf", p, raw["w"][i], precision=hi)
            + raw["b"][i][None], 0.0)
        feat_sum = feat_sum + jnp.sum(y, axis=1)
    favg = (feat_sum / (3.0 * HW)).astype(jnp.bfloat16).astype(jnp.float32)
    return jnp.dot(favg, raw["wc"], precision=hi) + raw["bc"]


if __name__ == "__main__":
    B, Cin, H, W = 2, 9, 16, 16
    num_ftrs, num_classes = 32, 2

    key = jax.random.PRNGKey(0)
    kx, kp = jax.random.split(key)
    x = jax.random.normal(kx, (B, Cin, H, W), jnp.float32)
    params, raw = make_params(kp, num_ftrs, num_classes)

    out = googlenet_trip_mean_forward(x, params, num_classes=num_classes)
    out = jax.block_until_ready(out)

    ref = reference_forward(x, raw, num_ftrs, num_classes)
    assert out.shape == (B, num_classes)
    err = float(jnp.max(jnp.abs(out - ref)))
    assert jnp.allclose(out, ref, rtol=5e-3, atol=5e-3), err

    print("KERNEL_OK")
</pallas_src>

<mosaic_0001>
module attributes {stable_mosaic.version = 11 : i64} {
  func.func @_fused_kernel(%arg0: i32, %arg1: i32, %arg2: memref<2x256x128xbf16, #tpu.memory_space<vmem>>, %arg3: memref<128x384xbf16, #tpu.memory_space<vmem>>, %arg4: memref<1x384xf32, #tpu.memory_space<vmem>>, %arg5: memref<128x128xbf16, #tpu.memory_space<vmem>>, %arg6: memref<1x128xf32, #tpu.memory_space<vmem>>, %arg7: memref<2x128xf32, #tpu.memory_space<vmem>>, %arg8: memref<2x128xf32, #tpu.memory_space<vmem>>) attributes {dimension_semantics = [#tpu.dimension_semantics<parallel>, #tpu.dimension_semantics<arbitrary>], iteration_bounds = array<i64: 1, 1>, scalar_prefetch = 0 : i64, scratch_operands = 1 : i64, tpu.core_type = #tpu.core_type<tc>, window_params = [{transform_indices = @transform_0, window_bounds = array<i64: 2, 256, 128>}, {pipeline_mode = #tpu.pipeline_mode<synchronous>, transform_indices = @transform_1, window_bounds = array<i64: 128, 384>}, {pipeline_mode = #tpu.pipeline_mode<synchronous>, transform_indices = @transform_2, window_bounds = array<i64: 1, 384>}, {pipeline_mode = #tpu.pipeline_mode<synchronous>, transform_indices = @transform_3, window_bounds = array<i64: 128, 128>}, {pipeline_mode = #tpu.pipeline_mode<synchronous>, transform_indices = @transform_4, window_bounds = array<i64: 1, 128>}, {transform_indices = @transform_5, window_bounds = array<i64: 2, 128>}]} {
    %c0_i32 = arith.constant 0 : i32
    %0 = arith.cmpi eq, %arg1, %c0_i32 : i32
    %1 = arith.extui %0 : i1 to i32
    %c0_i32_0 = arith.constant 0 : i32
    %2 = arith.cmpi ne, %1, %c0_i32_0 : i32
    scf.if %2 {
      %cst_25 = arith.constant 0.000000e+00 : f32
      %48 = vector.broadcast %cst_25 : f32 to vector<2x128xf32>
      %c0_26 = arith.constant 0 : index
      %c0_27 = arith.constant 0 : index
      %49 = vector.load %arg8[%c0_26, %c0_27] : memref<2x128xf32, #tpu.memory_space<vmem>>, vector<2x128xf32>
      tpu.vector_store %arg8[%c0_26, %c0_27], %48 {strides = array<i32>} : memref<2x128xf32, #tpu.memory_space<vmem>>, vector<2x128xf32>,
    } else {
    }
    %c0 = arith.constant 0 : index
    %c0_1 = arith.constant 0 : index
    %3 = vector.load %arg3[%c0, %c0_1] : memref<128x384xbf16, #tpu.memory_space<vmem>>, vector<128x384xbf16>
    %c0_2 = arith.constant 0 : index
    %c0_3 = arith.constant 0 : index
    %4 = vector.load %arg4[%c0_2, %c0_3] : memref<1x384xf32, #tpu.memory_space<vmem>>, vector<1x384xf32>
    %c0_i32_4 = arith.constant 0 : i32
    %c128_i32 = arith.constant 128 : i32
    %5 = arith.muli %c0_i32_4, %c128_i32 : i32
    %6 = tpu.assume_multiple %5, 128 : i32
    %c0_5 = arith.constant 0 : index
    %7 = arith.index_cast %6 : i32 to index
    %c0_6 = arith.constant 0 : index
    %8 = vector.load %arg2[%c0_5, %7, %c0_6] : memref<2x256x128xbf16, #tpu.memory_space<vmem>>, vector<2x128x128xbf16>
    %9 = vector.shape_cast %8 : vector<2x128x128xbf16> to vector<256x128xbf16>
    %cst = arith.constant dense<0.000000e+00> : vector<256x384xf32>
    %10 = tpu.matmul %9, %3, %cst {dimension_numbers = #tpu.dot_dimension_numbers<[1], [0], [0], [1], [0, 0, 1, 1], [], []>} : vector<256x128xbf16>, vector<128x384xbf16>, vector<256x384xf32> -> vector<256x384xf32>
    %11 = vector.broadcast %4 : vector<1x384xf32> to vector<256x384xf32>
    %12 = arith.addf %10, %11 : vector<256x384xf32>
    %cst_7 = arith.constant 0.000000e+00 : f32
    %13 = vector.broadcast %cst_7 : f32 to vector<256x384xf32>
    %14 = arith.maximumf %12, %13 : vector<256x384xf32>
    %15 = vector.extract_strided_slice %14 {offsets = [0, 0], sizes = [256, 128], strides = [1, 1]} : vector<256x384xf32> to vector<256x128xf32>
    %16 = vector.extract_strided_slice %14 {offsets = [0, 128], sizes = [256, 128], strides = [1, 1]} : vector<256x384xf32> to vector<256x128xf32>
    %17 = arith.addf %15, %16 : vector<256x128xf32>
    %18 = vector.extract_strided_slice %14 {offsets = [0, 256], sizes = [256, 128], strides = [1, 1]} : vector<256x384xf32> to vector<256x128xf32>
    %19 = arith.addf %17, %18 : vector<256x128xf32>
    %c0_8 = arith.constant 0 : index
    %c0_9 = arith.constant 0 : index
    %20 = vector.load %arg8[%c0_8, %c0_9] : memref<2x128xf32, #tpu.memory_space<vmem>>, vector<2x128xf32>
    %21 = vector.shape_cast %19 : vector<256x128xf32> to vector<2x128x128xf32>
    %cst_10 = arith.constant dense<0.000000e+00> : vector<2x128xf32>
    %22 = vector.multi_reduction <add>, %21, %cst_10 [1] : vector<2x128x128xf32> to vector<2x128xf32>
    %23 = arith.addf %20, %22 : vector<2x128xf32>
    %c0_11 = arith.constant 0 : index
    %c0_12 = arith.constant 0 : index
    %24 = vector.load %arg8[%c0_11, %c0_12] : memref<2x128xf32, #tpu.memory_space<vmem>>, vector<2x128xf32>
    tpu.vector_store %arg8[%c0_11, %c0_12], %23 {strides = array<i32>} : memref<2x128xf32, #tpu.memory_space<vmem>>, vector<2x128xf32>,
    %c1_i32 = arith.constant 1 : i32
    %c128_i32_13 = arith.constant 128 : i32
    %25 = arith.muli %c1_i32, %c128_i32_13 : i32
    %26 = tpu.assume_multiple %25, 128 : i32
    %c0_14 = arith.constant 0 : index
    %27 = arith.index_cast %26 : i32 to index
    %c0_15 = arith.constant 0 : index
    %28 = vector.load %arg2[%c0_14, %27, %c0_15] : memref<2x256x128xbf16, #tpu.memory_space<vmem>>, vector<2x128x128xbf16>
    %29 = vector.shape_cast %28 : vector<2x128x128xbf16> to vector<256x128xbf16>
    %cst_16 = arith.constant dense<0.000000e+00> : vector<256x384xf32>
    %30 = tpu.matmul %29, %3, %cst_16 {dimension_numbers = #tpu.dot_dimension_numbers<[1], [0], [0], [1], [0, 0, 1, 1], [], []>} : vector<256x128xbf16>, vector<128x384xbf16>, vector<256x384xf32> -> vector<256x384xf32>
    %31 = vector.broadcast %4 : vector<1x384xf32> to vector<256x384xf32>
    %32 = arith.addf %30, %31 : vector<256x384xf32>
    %cst_17 = arith.constant 0.000000e+00 : f32
    %33 = vector.broadcast %cst_17 : f32 to vector<256x384xf32>
    %34 = arith.maximumf %32, %33 : vector<256x384xf32>
    %35 = vector.extract_strided_slice %34 {offsets = [0, 0], sizes = [256, 128], strides = [1, 1]} : vector<256x384xf32> to vector<256x128xf32>
    %36 = vector.extract_strided_slice %34 {offsets = [0, 128], sizes = [256, 128], strides = [1, 1]} : vector<256x384xf32> to vector<256x128xf32>
    %37 = arith.addf %35, %36 : vector<256x128xf32>
    %38 = vector.extract_strided_slice %34 {offsets = [0, 256], sizes = [256, 128], strides = [1, 1]} : vector<256x384xf32> to vector<256x128xf32>
    %39 = arith.addf %37, %38 : vector<256x128xf32>
    %c0_18 = arith.constant 0 : index
    %c0_19 = arith.constant 0 : index
    %40 = vector.load %arg8[%c0_18, %c0_19] : memref<2x128xf32, #tpu.memory_space<vmem>>, vector<2x128xf32>
    %41 = vector.shape_cast %39 : vector<256x128xf32> to vector<2x128x128xf32>
    %cst_20 = arith.constant dense<0.000000e+00> : vector<2x128xf32>
    %42 = vector.multi_reduction <add>, %41, %cst_20 [1] : vector<2x128x128xf32> to vector<2x128xf32>
    %43 = arith.addf %40, %42 : vector<2x128xf32>
    %c0_21 = arith.constant 0 : index
    %c0_22 = arith.constant 0 : index
    %44 = vector.load %arg8[%c0_21, %c0_22] : memref<2x128xf32, #tpu.memory_space<vmem>>, vector<2x128xf32>
    tpu.vector_store %arg8[%c0_21, %c0_22], %43 {strides = array<i32>} : memref<2x128xf32, #tpu.memory_space<vmem>>, vector<2x128xf32>,
    %c2_i32 = arith.constant 2 : i32
    %c0_i32_23 = arith.constant 0 : i32
    %45 = arith.cmpi eq, %arg1, %c0_i32_23 : i32
    %46 = arith.extui %45 : i1 to i32
    %c0_i32_24 = arith.constant 0 : i32
    %47 = arith.cmpi ne, %46, %c0_i32_24 : i32
    scf.if %47 {
      %c0_25 = arith.constant 0 : index
      %c0_26 = arith.constant 0 : index
      %48 = vector.load %arg8[%c0_25, %c0_26] : memref<2x128xf32, #tpu.memory_space<vmem>>, vector<2x128xf32>
      %cst_27 = arith.constant 0.00130208337 : f32
      %49 = vector.broadcast %cst_27 : f32 to vector<2x128xf32>
      %50 = arith.mulf %48, %49 : vector<2x128xf32>
      %51 = arith.truncf %50 : vector<2x128xf32> to vector<2x128xbf16>
      %c0_28 = arith.constant 0 : index
      %c0_29 = arith.constant 0 : index
      %52 = vector.load %arg5[%c0_28, %c0_29] : memref<128x128xbf16, #tpu.memory_space<vmem>>, vector<128x128xbf16>
      %cst_30 = arith.constant dense<0.000000e+00> : vector<2x128xf32>
      %53 = tpu.matmul %51, %52, %cst_30 {dimension_numbers = #tpu.dot_dimension_numbers<[1], [0], [0], [1], [0, 0, 1, 1], [], []>} : vector<2x128xbf16>, vector<128x128xbf16>, vector<2x128xf32> -> vector<2x128xf32>
      %c0_31 = arith.constant 0 : index
      %c0_32 = arith.constant 0 : index
      %54 = vector.load %arg6[%c0_31, %c0_32] : memref<1x128xf32, #tpu.memory_space<vmem>>, vector<1x128xf32>
      %55 = vector.broadcast %54 : vector<1x128xf32> to vector<2x128xf32>
      %56 = arith.addf %53, %55 : vector<2x128xf32>
      %c0_33 = arith.constant 0 : index
      %c0_34 = arith.constant 0 : index
      %57 = vector.load %arg7[%c0_33, %c0_34] : memref<2x128xf32, #tpu.memory_space<vmem>>, vector<2x128xf32>
      tpu.vector_store %arg7[%c0_33, %c0_34], %56 {strides = array<i32>} : memref<2x128xf32, #tpu.memory_space<vmem>>, vector<2x128xf32>,
    } else {
    }
    return
  }
  func.func @transform_0(%arg0: i32, %arg1: i32) -> (i32, i32, i32) {
    %c0_i32 = arith.constant 0 : i32
    %c0_i32_0 = arith.constant 0 : i32
    return %arg0, %arg1, %c0_i32 : i32, i32, i32
  }
  func.func @transform_1(%arg0: i32, %arg1: i32) -> (i32, i32) {
    %c0_i32 = arith.constant 0 : i32
    %c0_i32_0 = arith.constant 0 : i32
    %c0_i32_1 = arith.constant 0 : i32
    return %c0_i32, %c0_i32_0 : i32, i32
  }
  func.func @transform_2(%arg0: i32, %arg1: i32) -> (i32, i32) {
    %c0_i32 = arith.constant 0 : i32
    %c0_i32_0 = arith.constant 0 : i32
    %c0_i32_1 = arith.constant 0 : i32
    return %c0_i32, %c0_i32_0 : i32, i32
  }
  func.func @transform_3(%arg0: i32, %arg1: i32) -> (i32, i32) {
    %c0_i32 = arith.constant 0 : i32
    %c0_i32_0 = arith.constant 0 : i32
    %c0_i32_1 = arith.constant 0 : i32
    return %c0_i32, %c0_i32_0 : i32, i32
  }
  func.func @transform_4(%arg0: i32, %arg1: i32) -> (i32, i32) {
    %c0_i32 = arith.constant 0 : i32
    %c0_i32_0 = arith.constant 0 : i32
    %c0_i32_1 = arith.constant 0 : i32
    return %c0_i32, %c0_i32_0 : i32, i32
  }
  func.func @transform_5(%arg0: i32, %arg1: i32) -> (i32, i32) {
    %c0_i32 = arith.constant 0 : i32
    %c0_i32_0 = arith.constant 0 : i32
    return %arg0, %c0_i32 : i32, i32
  }
}

</mosaic_0001>

<llo_original>
// kernel: googlenet_trip_mean_forward.1
$region0: #{googlenet_trip_mean_forward.1}
  #allocation0 [shape = 'u32[]', space=smem, size = 0x4, offset = 0x4, fixed_abs, tag = 'smem constant byte address 0x4 - core index']
  #allocation1 [shape = 'u32[144,128]{1,0:T(1,128)}', space=vmem, size = 0x12000, scoped, tag = 'internal scratch']
  #allocation2 [shape = 'f32[2,128]{1,0:T(2,128)}', space=vmem, size = 0x400, scoped, tag = 'scratch operand']
  %s0 = inlined_call_operand.vmem [shape: bf16[2,256,128], index: 0, kind: input, shape index: {}]
  %s1 = inlined_call_operand.vmem [shape: bf16[128,384], index: 1, kind: input, shape index: {}]
  %s2 = inlined_call_operand.vmem [shape: f32[1,384], index: 2, kind: input, shape index: {}]
  %s3 = inlined_call_operand.vmem [shape: bf16[128,128], index: 3, kind: input, shape index: {}]
  %s4 = inlined_call_operand.vmem [shape: f32[1,128], index: 4, kind: input, shape index: {}]
  %s5 = inlined_call_operand.hbm [shape: f32[2,128], index: 5, kind: output, shape index: {}]
  %s6 = sld [smem:[#allocation0]]
  $region38: #{googlenet_trip_mean_forward.1} parent=0
    _
  %s8 = ssub.s32 1, %s6
  %s9 = scalar_select 0, %s8, %s6
  $region1: #{googlenet_trip_mean_forward.1} parent=0
    #allocation3 [shape = 'u8[1024]{0}', space=vmem, size = 0x400, scoped, tag = 'output window, operand 0, single buffered']
    #allocation4 [shape = 's32[1]{0}', space=sflag, size = 0x4, scoped, tag = 'scoped memory for googlenet_trip_mean_forward.1']
    %10 = vsyncpa [#allocation4], 0
    // Predicated region
    $region2: #{googlenet_trip_mean_forward.1} parent=1 // pred_check
      _
    $region3: #{googlenet_trip_mean_forward.1} parent=1 // pred_check_branch
      %12 = sbr.rel (0) target = $region5
    $region4: #{googlenet_trip_mean_forward.1} parent=1 // pred_region
      _
    $region5: #{googlenet_trip_mean_forward.1} parent=1 // pred_fallthru
      _
    // Predicated region
    $region6: #{googlenet_trip_mean_forward.1} parent=1 // pred_check
      _
    $region7: #{googlenet_trip_mean_forward.1} parent=1 // pred_check_branch
      %14 = sbr.rel (0) target = $region9
    $region8: #{googlenet_trip_mean_forward.1} parent=1 // pred_region
      _
    $region9: #{googlenet_trip_mean_forward.1} parent=1 // pred_fallthru
      _
    // Predicated region
    $region10: #{googlenet_trip_mean_forward.1} parent=1 // pred_check
      _
    $region11: #{googlenet_trip_mean_forward.1} parent=1 // pred_check_branch
      %16 = sbr.rel (0) target = $region13
    $region12: #{googlenet_trip_mean_forward.1} parent=1 // pred_region
      _
    $region13: #{googlenet_trip_mean_forward.1} parent=1 // pred_fallthru
      _
    // Predicated region
    $region14: #{googlenet_trip_mean_forward.1} parent=1 // pred_check
      _
    $region15: #{googlenet_trip_mean_forward.1} parent=1 // pred_check_branch
      %18 = sbr.rel (0) target = $region17
    $region16: #{googlenet_trip_mean_forward.1} parent=1 // pred_region
      _
    $region17: #{googlenet_trip_mean_forward.1} parent=1 // pred_fallthru
      _
    // Predicated region
    $region18: #{googlenet_trip_mean_forward.1} parent=1 // pred_check
      _
    $region19: #{googlenet_trip_mean_forward.1} parent=1 // pred_check_branch
      %20 = sbr.rel (0) target = $region21
    $region20: #{googlenet_trip_mean_forward.1} parent=1 // pred_region
      _
    $region21: #{googlenet_trip_mean_forward.1} parent=1 // pred_fallthru
      _
    %p22 = scmp.eq.s32.totalorder 0, 0
    // Predicated region
    $region22: #{googlenet_trip_mean_forward.1} parent=1 // pred_check
      %p23 = pneg %p22
    $region23: #{googlenet_trip_mean_forward.1} parent=1 // pred_check_branch
      %25 = sbr.rel (%p23) target = $region25
    $region24: #{googlenet_trip_mean_forward.1} parent=1 // pred_region
      %26 = vst [vmem:[#allocation2] sm:$0x3] 0.0
    $region25: #{googlenet_trip_mean_forward.1} parent=1 // pred_fallthru
      _
    %v27 = vld [vmem:[%s1] sm:$0xff]
    %v28 = vld [vmem:[%s1 + $0x8] sm:$0xf]
    %v29 = vld [vmem:[%s1 + $0xc] sm:$0xff]
    %v30 = vld [vmem:[%s1 + $0x14] sm:$0xf]
    %v31 = vld [vmem:[%s1 + $0x18] sm:$0xff]
    %v32 = vld [vmem:[%s1 + $0x20] sm:$0xf]
    %v33 = vld [vmem:[%s1 + $0x24] sm:$0xff]
    %v34 = vld [vmem:[%s1 + $0x2c] sm:$0xf]
    %v35 = vld [vmem:[%s1 + $0x30] sm:$0xff]
    %v36 = vld [vmem:[%s1 + $0x38] sm:$0xf]
    %v37 = vld [vmem:[%s1 + $0x3c] sm:$0xff]
    %v38 = vld [vmem:[%s1 + $0x44] sm:$0xf]
    %v39 = vld [vmem:[%s1 + $0x48] sm:$0xff]
    %v40 = vld [vmem:[%s1 + $0x50] sm:$0xf]
    %v41 = vld [vmem:[%s1 + $0x54] sm:$0xff]
    %v42 = vld [vmem:[%s1 + $0x5c] sm:$0xf]
    %v43 = vld [vmem:[%s1 + $0x60] sm:$0xff]
    %v44 = vld [vmem:[%s1 + $0x68] sm:$0xf]
    %v45 = vld [vmem:[%s1 + $0x6c] sm:$0xff]
    %v46 = vld [vmem:[%s1 + $0x74] sm:$0xf]
    %v47 = vld [vmem:[%s1 + $0x78] sm:$0xff]
    %v48 = vld [vmem:[%s1 + $0x80] sm:$0xf]
    %v49 = vld [vmem:[%s1 + $0x84] sm:$0xff]
    %v50 = vld [vmem:[%s1 + $0x8c] sm:$0xf]
    %v51 = vld [vmem:[%s1 + $0x90] sm:$0xff]
    %v52 = vld [vmem:[%s1 + $0x98] sm:$0xf]
    %v53 = vld [vmem:[%s1 + $0x9c] sm:$0xff]
    %v54 = vld [vmem:[%s1 + $0xa4] sm:$0xf]
    %v55 = vld [vmem:[%s1 + $0xa8] sm:$0xff]
    %v56 = vld [vmem:[%s1 + $0xb0] sm:$0xf]
    %v57 = vld [vmem:[%s1 + $0xb4] sm:$0xff]
    %v58 = vld [vmem:[%s1 + $0xbc] sm:$0xf]
    %v59 = vld [vmem:[%s2] sm:$0x7]
    %v60 = vld [vmem:[%s0] sm:$0xf]
    %v61 = vld [vmem:[%s0 + $0x4] sm:$0xf]
    %v62 = vld [vmem:[%s0 + $0x8] sm:$0xf]
    %v63 = vld [vmem:[%s0 + $0xc] sm:$0xf]
    %v64 = vld [vmem:[%s0 + $0x10] sm:$0xf]
    %v65 = vld [vmem:[%s0 + $0x14] sm:$0xf]
    %v66 = vld [vmem:[%s0 + $0x18] sm:$0xf]
    %v67 = vld [vmem:[%s0 + $0x1c] sm:$0xf]
    %v68 = vld [vmem:[%s0 + $0x20] sm:$0xf]
    %v69 = vld [vmem:[%s0 + $0x24] sm:$0xf]
    %v70 = vld [vmem:[%s0 + $0x28] sm:$0xf]
    %v71 = vld [vmem:[%s0 + $0x2c] sm:$0xf]
    %v72 = vld [vmem:[%s0 + $0x30] sm:$0xf]
    %v73 = vld [vmem:[%s0 + $0x34] sm:$0xf]
    %v74 = vld [vmem:[%s0 + $0x38] sm:$0xf]
    %v75 = vld [vmem:[%s0 + $0x3c] sm:$0xf]
    %v76 = vld [vmem:[%s0 + $0x80] sm:$0xf]
    %v77 = vld [vmem:[%s0 + $0x84] sm:$0xf]
    %v78 = vld [vmem:[%s0 + $0x88] sm:$0xf]
    %v79 = vld [vmem:[%s0 + $0x8c] sm:$0xf]
    %v80 = vld [vmem:[%s0 + $0x90] sm:$0xf]
    %v81 = vld [vmem:[%s0 + $0x94] sm:$0xf]
    %v82 = vld [vmem:[%s0 + $0x98] sm:$0xf]
    %v83 = vld [vmem:[%s0 + $0x9c] sm:$0xf]
    %v84 = vld [vmem:[%s0 + $0xa0] sm:$0xf]
    %v85 = vld [vmem:[%s0 + $0xa4] sm:$0xf]
    %v86 = vld [vmem:[%s0 + $0xa8] sm:$0xf]
    %v87 = vld [vmem:[%s0 + $0xac] sm:$0xf]
    %v88 = vld [vmem:[%s0 + $0xb0] sm:$0xf]
    %v89 = vld [vmem:[%s0 + $0xb4] sm:$0xf]
    %v90 = vld [vmem:[%s0 + $0xb8] sm:$0xf]
    %v91 = vld [vmem:[%s0 + $0xbc] sm:$0xf]
    %v93 = vlaneseq
    %v94 = vshrl.u32 %v93, 7
    %v95 = vsub.s32 0, %v94
    %v96 = vrot.slane %v59, %v95
    %v97 = vlaneseq
    %v98 = vshrl.u32 %v97, 7
    %v99 = vsub.s32 1, %v98
    %v100 = vrot.slane %v59, %v99
    %v101 = vlaneseq
    %v102 = vshrl.u32 %v101, 7
    %v103 = vsub.s32 2, %v102
    %v104 = vrot.slane %v59, %v103
    %v140 = vunpack.c.l.b16 %v60
    %v141 = vunpack.c.l.b16 %v61
    %v142 = vunpack.c.l.b16 %v62
    %v143 = vunpack.c.l.b16 %v63
    %v144 = vunpack.c.l.b16 %v64
    %v145 = vunpack.c.l.b16 %v65
    %v146 = vunpack.c.l.b16 %v66
    %v147 = vunpack.c.l.b16 %v67
    %v148 = vunpack.c.l.b16 %v68
    %v149 = vunpack.c.l.b16 %v69
    %v150 = vunpack.c.l.b16 %v70
    %v151 = vunpack.c.l.b16 %v71
    %v152 = vunpack.c.l.b16 %v72
    %v153 = vunpack.c.l.b16 %v73
    %v154 = vunpack.c.l.b16 %v74
    %v155 = vunpack.c.l.b16 %v75
    %v156 = vunpack.c.l.b16 %v76
    %v157 = vunpack.c.l.b16 %v77
    %v158 = vunpack.c.l.b16 %v78
    %v159 = vunpack.c.l.b16 %v79
    %v160 = vunpack.c.l.b16 %v80
    %v161 = vunpack.c.l.b16 %v81
    %v162 = vunpack.c.l.b16 %v82
    %v163 = vunpack.c.l.b16 %v83
    %v164 = vunpack.c.l.b16 %v84
    %v165 = vunpack.c.l.b16 %v85
    %v166 = vunpack.c.l.b16 %v86
    %v167 = vunpack.c.l.b16 %v87
    %v168 = vunpack.c.l.b16 %v88
    %v169 = vunpack.c.l.b16 %v89
    %v170 = vunpack.c.l.b16 %v90
    %v171 = vunpack.c.l.b16 %v91
    %v172 = vpack.c.b16 %v141, %v140
    %v173 = vpack.c.b16 %v143, %v142
    %v174 = vpack.c.b16 %v145, %v144
    %v175 = vpack.c.b16 %v147, %v146
    %v176 = vpack.c.b16 %v149, %v148
    %v177 = vpack.c.b16 %v151, %v150
    %v178 = vpack.c.b16 %v153, %v152
    %v179 = vpack.c.b16 %v155, %v154
    %v180 = vpack.c.b16 %v157, %v156
    %v181 = vpack.c.b16 %v159, %v158
    %v182 = vpack.c.b16 %v161, %v160
    %v183 = vpack.c.b16 %v163, %v162
    %v184 = vpack.c.b16 %v165, %v164
    %v185 = vpack.c.b16 %v167, %v166
    %v186 = vpack.c.b16 %v169, %v168
    %v187 = vpack.c.b16 %v171, %v170
    %v236 = vunpack.c.l.b16 %v27
    %v237 = vunpack.c.h.b16 %v27
    %v238 = vunpack.c.l.b16 %v28
    %v239 = vunpack.c.l.b16 %v29
    %v240 = vunpack.c.h.b16 %v29
    %v241 = vunpack.c.l.b16 %v30
    %v242 = vunpack.c.l.b16 %v31
    %v243 = vunpack.c.h.b16 %v31
    %v244 = vunpack.c.l.b16 %v32
    %v245 = vunpack.c.l.b16 %v33
    %v246 = vunpack.c.h.b16 %v33
    %v247 = vunpack.c.l.b16 %v34
    %v248 = vunpack.c.l.b16 %v35
    %v249 = vunpack.c.h.b16 %v35
    %v250 = vunpack.c.l.b16 %v36
    %v251 = vunpack.c.l.b16 %v37
    %v252 = vunpack.c.h.b16 %v37
    %v253 = vunpack.c.l.b16 %v38
    %v254 = vunpack.c.l.b16 %v39
    %v255 = vunpack.c.h.b16 %v39
    %v256 = vunpack.c.l.b16 %v40
    %v257 = vunpack.c.l.b16 %v41
    %v258 = vunpack.c.h.b16 %v41
    %v259 = vunpack.c.l.b16 %v42
    %v260 = vunpack.c.l.b16 %v43
    %v261 = vunpack.c.h.b16 %v43
    %v262 = vunpack.c.l.b16 %v44
    %v263 = vunpack.c.l.b16 %v45
    %v264 = vunpack.c.h.b16 %v45
    %v265 = vunpack.c.l.b16 %v46
    %v266 = vunpack.c.l.b16 %v47
    %v267 = vunpack.c.h.b16 %v47
    %v268 = vunpack.c.l.b16 %v48
    %v269 = vunpack.c.l.b16 %v49
    %v270 = vunpack.c.h.b16 %v49
    %v271 = vunpack.c.l.b16 %v50
    %v272 = vunpack.c.l.b16 %v51
    %v273 = vunpack.c.h.b16 %v51
    %v274 = vunpack.c.l.b16 %v52
    %v275 = vunpack.c.l.b16 %v53
    %v276 = vunpack.c.h.b16 %v53
    %v277 = vunpack.c.l.b16 %v54
    %v278 = vunpack.c.l.b16 %v55
    %v279 = vunpack.c.h.b16 %v55
    %v280 = vunpack.c.l.b16 %v56
    %v281 = vunpack.c.l.b16 %v57
    %v282 = vunpack.c.h.b16 %v57
    %v283 = vunpack.c.l.b16 %v58
    %v284 = vpack.c.b16 %v239, %v236
    %v285 = vpack.c.b16 %v240, %v237
    %v286 = vpack.c.b16 %v241, %v238
    %v287 = vpack.c.b16 %v245, %v242
    %v288 = vpack.c.b16 %v246, %v243
    %v289 = vpack.c.b16 %v247, %v244
    %v290 = vpack.c.b16 %v251, %v248
    %v291 = vpack.c.b16 %v252, %v249
    %v292 = vpack.c.b16 %v253, %v250
    %v293 = vpack.c.b16 %v257, %v254
    %v294 = vpack.c.b16 %v258, %v255
    %v295 = vpack.c.b16 %v259, %v256
    %v296 = vpack.c.b16 %v263, %v260
    %v297 = vpack.c.b16 %v264, %v261
    %v298 = vpack.c.b16 %v265, %v262
    %v299 = vpack.c.b16 %v269, %v266
    %v300 = vpack.c.b16 %v270, %v267
    %v301 = vpack.c.b16 %v271, %v268
    %v302 = vpack.c.b16 %v275, %v272
    %v303 = vpack.c.b16 %v276, %v273
    %v304 = vpack.c.b16 %v277, %v274
    %v305 = vpack.c.b16 %v281, %v278
    %v306 = vpack.c.b16 %v282, %v279
    %v307 = vpack.c.b16 %v283, %v280
    %332 = vmatprep.subr.bf16.mxu0 %v306
    %333 = vmatpush1.bf16.msra.mxu0 %v305
    %334 = vmatprep.subr.bf16.mxu0 %v303
    %335 = vmatpush1.bf16.msra.mxu0 %v302
    %336 = vmatprep.subr.bf16.mxu0 %v300
    %337 = vmatpush1.bf16.msra.mxu0 %v299
    %338 = vmatprep.subr.bf16.mxu0 %v297
    %339 = vmatpush1.bf16.msra.mxu0 %v296
    %340 = vmatprep.subr.bf16.mxu0 %v294
    %341 = vmatpush1.bf16.msra.mxu0 %v293
    %342 = vmatprep.subr.bf16.mxu0 %v291
    %343 = vmatpush1.bf16.msra.mxu0 %v290
    %344 = vmatprep.subr.bf16.mxu0 %v288
    %345 = vmatpush1.bf16.msra.mxu0 %v287
    %346 = vmatprep.subr.bf16.mxu0 %v285
    %347 = vmatpush1.bf16.msra.mxu0 %v284
    %348 = vmatprep.subr.bf16.mxu0 0
    %349 = vmatpush2.bf16.msra.mxu0 0
    %350 = vmatprep.subr.bf16.mxu0 0
    %351 = vmatpush2.bf16.msra.mxu0 0
    %352 = vmatprep.subr.bf16.mxu0 0
    %353 = vmatpush2.bf16.msra.mxu0 0
    %354 = vmatprep.subr.bf16.mxu0 0
    %355 = vmatpush2.bf16.msra.mxu0 0
    %356 = vmatprep.subr.bf16.mxu0 0
    %357 = vmatpush2.bf16.msra.mxu0 0
    %358 = vmatprep.subr.bf16.mxu0 0
    %359 = vmatpush2.bf16.msra.mxu0 0
    %360 = vmatprep.subr.bf16.mxu0 0
    %361 = vmatpush2.bf16.msra.mxu0 0
    %362 = vmatprep.subr.bf16.mxu0 0
    %363 = vmatpush2.bf16.msra.mxu0 0
    %364 = vmatprep.mubr.bf16.mxu0 0
    %365 = vmatmul.mubr.bf16.gmra.mxu0 %v172
    %v366 = vpop.f32.mrf.mxu0
    %v367 = vadd.f32 %v96, %v366
    %v368 = vpop.f32.mrf.mxu0
    %v369 = vadd.f32 %v100, %v368
    %v370 = vpop.f32.mrf.mxu0
    %v371 = vadd.f32 %v96, %v370
    %v372 = vpop.f32.mrf.mxu0
    %v373 = vadd.f32 %v100, %v372
    %374 = vmatprep.mubr.bf16.mxu0 0
    %375 = vmatmul.mubr.bf16.gmra.mxu0 %v173
    %v376 = vpop.f32.mrf.mxu0
    %v377 = vadd.f32 %v96, %v376
    %v378 = vpop.f32.mrf.mxu0
    %v379 = vadd.f32 %v100, %v378
    %v380 = vpop.f32.mrf.mxu0
    %v381 = vadd.f32 %v96, %v380
    %v382 = vpop.f32.mrf.mxu0
    %v383 = vadd.f32 %v100, %v382
    %384 = vmatprep.mubr.bf16.mxu0 0
    %385 = vmatmul.mubr.bf16.gmra.mxu0 %v174
    %v386 = vpop.f32.mrf.mxu0
    %v387 = vadd.f32 %v96, %v386
    %v388 = vpop.f32.mrf.mxu0
    %v389 = vadd.f32 %v100, %v388
    %v390 = vpop.f32.mrf.mxu0
    %v391 = vadd.f32 %v96, %v390
    %v392 = vpop.f32.mrf.mxu0
    %v393 = vadd.f32 %v100, %v392
    %394 = vmatprep.mubr.bf16.mxu0 0
    %395 = vmatmul.mubr.bf16.gmra.mxu0 %v175
    %v396 = vpop.f32.mrf.mxu0
    %v397 = vadd.f32 %v96, %v396
    %v398 = vpop.f32.mrf.mxu0
    %v399 = vadd.f32 %v100, %v398
    %v400 = vpop.f32.mrf.mxu0
    %v401 = vadd.f32 %v96, %v400
    %v402 = vpop.f32.mrf.mxu0
    %v403 = vadd.f32 %v100, %v402
    %404 = vmatprep.mubr.bf16.mxu0 0
    %405 = vmatmul.mubr.bf16.gmra.mxu0 %v176
    %v406 = vpop.f32.mrf.mxu0
    %v407 = vadd.f32 %v96, %v406
    %v408 = vpop.f32.mrf.mxu0
    %v409 = vadd.f32 %v100, %v408
    %v410 = vpop.f32.mrf.mxu0
    %v411 = vadd.f32 %v96, %v410
    %v412 = vpop.f32.mrf.mxu0
    %v413 = vadd.f32 %v100, %v412
    %414 = vmatprep.mubr.bf16.mxu0 0
    %415 = vmatmul.mubr.bf16.gmra.mxu0 %v177
    %v416 = vpop.f32.mrf.mxu0
    %v417 = vadd.f32 %v96, %v416
    %v418 = vpop.f32.mrf.mxu0
    %v419 = vadd.f32 %v100, %v418
    %v420 = vpop.f32.mrf.mxu0
    %v421 = vadd.f32 %v96, %v420
    %v422 = vpop.f32.mrf.mxu0
    %v423 = vadd.f32 %v100, %v422
    %424 = vmatprep.mubr.bf16.mxu0 0
    %425 = vmatmul.mubr.bf16.gmra.mxu0 %v178
    %v426 = vpop.f32.mrf.mxu0
    %v427 = vadd.f32 %v96, %v426
    %v428 = vpop.f32.mrf.mxu0
    %v429 = vadd.f32 %v100, %v428
    %v430 = vpop.f32.mrf.mxu0
    %v431 = vadd.f32 %v96, %v430
    %v432 = vpop.f32.mrf.mxu0
    %v433 = vadd.f32 %v100, %v432
    %434 = vmatprep.mubr.bf16.mxu0 0
    %435 = vmatmul.mubr.bf16.gmra.mxu0 %v179
    %v436 = vpop.f32.mrf.mxu0
    %v437 = vadd.f32 %v96, %v436
    %v438 = vpop.f32.mrf.mxu0
    %v439 = vadd.f32 %v100, %v438
    %v440 = vpop.f32.mrf.mxu0
    %v441 = vadd.f32 %v96, %v440
    %v442 = vpop.f32.mrf.mxu0
    %v443 = vadd.f32 %v100, %v442
    %444 = vmatprep.mubr.bf16.mxu0 0
    %445 = vmatmul.mubr.bf16.gmra.mxu0 %v180
    %v446 = vpop.f32.mrf.mxu0
    %v447 = vadd.f32 %v96, %v446
    %v448 = vpop.f32.mrf.mxu0
    %v449 = vadd.f32 %v100, %v448
    %v450 = vpop.f32.mrf.mxu0
    %v451 = vadd.f32 %v96, %v450
    %v452 = vpop.f32.mrf.mxu0
    %v453 = vadd.f32 %v100, %v452
    %454 = vmatprep.mubr.bf16.mxu0 0
    %455 = vmatmul.mubr.bf16.gmra.mxu0 %v181
    %v456 = vpop.f32.mrf.mxu0
    %v457 = vadd.f32 %v96, %v456
    %v458 = vpop.f32.mrf.mxu0
    %v459 = vadd.f32 %v100, %v458
    %v460 = vpop.f32.mrf.mxu0
    %v461 = vadd.f32 %v96, %v460
    %v462 = vpop.f32.mrf.mxu0
    %v463 = vadd.f32 %v100, %v462
    %464 = vmatprep.mubr.bf16.mxu0 0
    %465 = vmatmul.mubr.bf16.gmra.mxu0 %v182
    %v466 = vpop.f32.mrf.mxu0
    %v467 = vadd.f32 %v96, %v466
    %v468 = vpop.f32.mrf.mxu0
    %v469 = vadd.f32 %v100, %v468
    %v470 = vpop.f32.mrf.mxu0
    %v471 = vadd.f32 %v96, %v470
    %v472 = vpop.f32.mrf.mxu0
    %v473 = vadd.f32 %v100, %v472
    %474 = vmatprep.mubr.bf16.mxu0 0
    %475 = vmatmul.mubr.bf16.gmra.mxu0 %v183
    %v476 = vpop.f32.mrf.mxu0
    %v477 = vadd.f32 %v96, %v476
    %v478 = vpop.f32.mrf.mxu0
    %v479 = vadd.f32 %v100, %v478
    %v480 = vpop.f32.mrf.mxu0
    %v481 = vadd.f32 %v96, %v480
    %v482 = vpop.f32.mrf.mxu0
    %v483 = vadd.f32 %v100, %v482
    %484 = vmatprep.mubr.bf16.mxu0 0
    %485 = vmatmul.mubr.bf16.gmra.mxu0 %v184
    %v486 = vpop.f32.mrf.mxu0
    %v487 = vadd.f32 %v96, %v486
    %v488 = vpop.f32.mrf.mxu0
    %v489 = vadd.f32 %v100, %v488
    %v490 = vpop.f32.mrf.mxu0
    %v491 = vadd.f32 %v96, %v490
    %v492 = vpop.f32.mrf.mxu0
    %v493 = vadd.f32 %v100, %v492
    %494 = vmatprep.mubr.bf16.mxu0 0
    %495 = vmatmul.mubr.bf16.gmra.mxu0 %v185
    %v496 = vpop.f32.mrf.mxu0
    %v497 = vadd.f32 %v96, %v496
    %v498 = vpop.f32.mrf.mxu0
    %v499 = vadd.f32 %v100, %v498
    %v500 = vpop.f32.mrf.mxu0
    %v501 = vadd.f32 %v96, %v500
    %v502 = vpop.f32.mrf.mxu0
    %v503 = vadd.f32 %v100, %v502
    %504 = vmatprep.mubr.bf16.mxu0 0
    %505 = vmatmul.mubr.bf16.gmra.mxu0 %v186
    %v506 = vpop.f32.mrf.mxu0
    %v507 = vadd.f32 %v96, %v506
    %v508 = vpop.f32.mrf.mxu0
    %v509 = vadd.f32 %v100, %v508
    %v510 = vpop.f32.mrf.mxu0
    %v511 = vadd.f32 %v96, %v510
    %v512 = vpop.f32.mrf.mxu0
    %v513 = vadd.f32 %v100, %v512
    %514 = vmatprep.mubr.bf16.mxu0 0
    %515 = vmatmul.mubr.bf16.gmra.mxu0 %v187
    %v516 = vpop.f32.mrf.mxu0
    %v517 = vadd.f32 %v96, %v516
    %v518 = vpop.f32.mrf.mxu0
    %v519 = vadd.f32 %v100, %v518
    %v520 = vpop.f32.mrf.mxu0
    %v521 = vadd.f32 %v96, %v520
    %v522 = vpop.f32.mrf.mxu0
    %v523 = vadd.f32 %v100, %v522
    %524 = vdwg.mxu0
    %525 = vmatprep.subr.bf16.mxu0 0
    %526 = vmatpush1.bf16.msra.mxu0 %v307
    %527 = vmatprep.subr.bf16.mxu0 0
    %528 = vmatpush1.bf16.msra.mxu0 %v304
    %529 = vmatprep.subr.bf16.mxu0 0
    %530 = vmatpush1.bf16.msra.mxu0 %v301
    %531 = vmatprep.subr.bf16.mxu0 0
    %532 = vmatpush1.bf16.msra.mxu0 %v298
    %533 = vmatprep.subr.bf16.mxu0 0
    %534 = vmatpush1.bf16.msra.mxu0 %v295
    %535 = vmatprep.subr.bf16.mxu0 0
    %536 = vmatpush1.bf16.msra.mxu0 %v292
    %537 = vmatprep.subr.bf16.mxu0 0
    %538 = vmatpush1.bf16.msra.mxu0 %v289
    %539 = vmatprep.subr.bf16.mxu0 0
    %540 = vmatpush1.bf16.msra.mxu0 %v286
    %541 = vmatprep.subr.bf16.mxu0 0
    %542 = vmatpush2.bf16.msra.mxu0 0
    %543 = vmatprep.subr.bf16.mxu0 0
    %544 = vmatpush2.bf16.msra.mxu0 0
    %545 = vmatprep.subr.bf16.mxu0 0
    %546 = vmatpush2.bf16.msra.mxu0 0
    %547 = vmatprep.subr.bf16.mxu0 0
    %548 = vmatpush2.bf16.msra.mxu0 0
    %549 = vmatprep.subr.bf16.mxu0 0
    %550 = vmatpush2.bf16.msra.mxu0 0
    %551 = vmatprep.subr.bf16.mxu0 0
    %552 = vmatpush2.bf16.msra.mxu0 0
    %553 = vmatprep.subr.bf16.mxu0 0
    %554 = vmatpush2.bf16.msra.mxu0 0
    %555 = vmatprep.subr.bf16.mxu0 0
    %556 = vmatpush2.bf16.msra.mxu0 0
    %557 = vmatprep.mubr.bf16.mxu0 0
    %558 = vmatmul.mubr.bf16.gmra.mxu0 %v172
    %v559 = vpop.f32.mrf.mxu0
    %v560 = vadd.f32 %v104, %v559
    %v561 = vpop.f32.mrf.mxu0
    %v562 = vpop.f32.mrf.mxu0
    %v563 = vadd.f32 %v104, %v562
    %v564 = vpop.f32.mrf.mxu0
    %565 = vmatprep.mubr.bf16.mxu0 0
    %566 = vmatmul.mubr.bf16.gmra.mxu0 %v173
    %v567 = vpop.f32.mrf.mxu0
    %v568 = vadd.f32 %v104, %v567
    %v569 = vpop.f32.mrf.mxu0
    %v570 = vpop.f32.mrf.mxu0
    %v571 = vadd.f32 %v104, %v570
    %v572 = vpop.f32.mrf.mxu0
    %573 = vmatprep.mubr.bf16.mxu0 0
    %574 = vmatmul.mubr.bf16.gmra.mxu0 %v174
    %v575 = vpop.f32.mrf.mxu0
    %v576 = vadd.f32 %v104, %v575
    %v577 = vpop.f32.mrf.mxu0
    %v578 = vpop.f32.mrf.mxu0
    %v579 = vadd.f32 %v104, %v578
    %v580 = vpop.f32.mrf.mxu0
    %581 = vmatprep.mubr.bf16.mxu0 0
    %582 = vmatmul.mubr.bf16.gmra.mxu0 %v175
    %v583 = vpop.f32.mrf.mxu0
    %v584 = vadd.f32 %v104, %v583
    %v585 = vpop.f32.mrf.mxu0
    %v586 = vpop.f32.mrf.mxu0
    %v587 = vadd.f32 %v104, %v586
    %v588 = vpop.f32.mrf.mxu0
    %589 = vmatprep.mubr.bf16.mxu0 0
    %590 = vmatmul.mubr.bf16.gmra.mxu0 %v176
    %v591 = vpop.f32.mrf.mxu0
    %v592 = vadd.f32 %v104, %v591
    %v593 = vpop.f32.mrf.mxu0
    %v594 = vpop.f32.mrf.mxu0
    %v595 = vadd.f32 %v104, %v594
    %v596 = vpop.f32.mrf.mxu0
    %597 = vmatprep.mubr.bf16.mxu0 0
    %598 = vmatmul.mubr.bf16.gmra.mxu0 %v177
    %v599 = vpop.f32.mrf.mxu0
    %v600 = vadd.f32 %v104, %v599
    %v601 = vpop.f32.mrf.mxu0
    %v602 = vpop.f32.mrf.mxu0
    %v603 = vadd.f32 %v104, %v602
    %v604 = vpop.f32.mrf.mxu0
    %605 = vmatprep.mubr.bf16.mxu0 0
    %606 = vmatmul.mubr.bf16.gmra.mxu0 %v178
    %v607 = vpop.f32.mrf.mxu0
    %v608 = vadd.f32 %v104, %v607
    %v609 = vpop.f32.mrf.mxu0
    %v610 = vpop.f32.mrf.mxu0
    %v611 = vadd.f32 %v104, %v610
    %v612 = vpop.f32.mrf.mxu0
    %613 = vmatprep.mubr.bf16.mxu0 0
    %614 = vmatmul.mubr.bf16.gmra.mxu0 %v179
    %v615 = vpop.f32.mrf.mxu0
    %v616 = vadd.f32 %v104, %v615
    %v617 = vpop.f32.mrf.mxu0
    %v618 = vpop.f32.mrf.mxu0
    %v619 = vadd.f32 %v104, %v618
    %v620 = vpop.f32.mrf.mxu0
    %621 = vmatprep.mubr.bf16.mxu0 0
    %622 = vmatmul.mubr.bf16.gmra.mxu0 %v180
    %v623 = vpop.f32.mrf.mxu0
    %v624 = vadd.f32 %v104, %v623
    %v625 = vpop.f32.mrf.mxu0
    %v626 = vpop.f32.mrf.mxu0
    %v627 = vadd.f32 %v104, %v626
    %v628 = vpop.f32.mrf.mxu0
    %629 = vmatprep.mubr.bf16.mxu0 0
    %630 = vmatmul.mubr.bf16.gmra.mxu0 %v181
    %v631 = vpop.f32.mrf.mxu0
    %v632 = vadd.f32 %v104, %v631
    %v633 = vpop.f32.mrf.mxu0
    %v634 = vpop.f32.mrf.mxu0
    %v635 = vadd.f32 %v104, %v634
    %v636 = vpop.f32.mrf.mxu0
    %637 = vmatprep.mubr.bf16.mxu0 0
    %638 = vmatmul.mubr.bf16.gmra.mxu0 %v182
    %v639 = vpop.f32.mrf.mxu0
    %v640 = vadd.f32 %v104, %v639
    %v641 = vpop.f32.mrf.mxu0
    %v642 = vpop.f32.mrf.mxu0
    %v643 = vadd.f32 %v104, %v642
    %v644 = vpop.f32.mrf.mxu0
    %645 = vmatprep.mubr.bf16.mxu0 0
    %646 = vmatmul.mubr.bf16.gmra.mxu0 %v183
    %v647 = vpop.f32.mrf.mxu0
    %v648 = vadd.f32 %v104, %v647
    %v649 = vpop.f32.mrf.mxu0
    %v650 = vpop.f32.mrf.mxu0
    %v651 = vadd.f32 %v104, %v650
    %v652 = vpop.f32.mrf.mxu0
    %653 = vmatprep.mubr.bf16.mxu0 0
    %654 = vmatmul.mubr.bf16.gmra.mxu0 %v184
    %v655 = vpop.f32.mrf.mxu0
    %v656 = vadd.f32 %v104, %v655
    %v657 = vpop.f32.mrf.mxu0
    %v658 = vpop.f32.mrf.mxu0
    %v659 = vadd.f32 %v104, %v658
    %v660 = vpop.f32.mrf.mxu0
    %661 = vmatprep.mubr.bf16.mxu0 0
    %662 = vmatmul.mubr.bf16.gmra.mxu0 %v185
    %v663 = vpop.f32.mrf.mxu0
    %v664 = vadd.f32 %v104, %v663
    %v665 = vpop.f32.mrf.mxu0
    %v666 = vpop.f32.mrf.mxu0
    %v667 = vadd.f32 %v104, %v666
    %v668 = vpop.f32.mrf.mxu0
    %669 = vmatprep.mubr.bf16.mxu0 0
    %670 = vmatmul.mubr.bf16.gmra.mxu0 %v186
    %v671 = vpop.f32.mrf.mxu0
    %v672 = vadd.f32 %v104, %v671
    %v673 = vpop.f32.mrf.mxu0
    %v674 = vpop.f32.mrf.mxu0
    %v675 = vadd.f32 %v104, %v674
    %v676 = vpop.f32.mrf.mxu0
    %677 = vmatprep.mubr.bf16.mxu0 0
    %678 = vmatmul.mubr.bf16.gmra.mxu0 %v187
    %v679 = vpop.f32.mrf.mxu0
    %v680 = vadd.f32 %v104, %v679
    %v681 = vpop.f32.mrf.mxu0
    %v682 = vpop.f32.mrf.mxu0
    %v683 = vadd.f32 %v104, %v682
    %v684 = vpop.f32.mrf.mxu0
    %685 = vdwg.mxu0
    %v686 = vmax.f32 %v367, 0.0
    %v687 = vmax.f32 %v369, 0.0
    %v688 = vmax.f32 %v560, 0.0
    %v689 = vmax.f32 %v371, 0.0
    %v690 = vmax.f32 %v373, 0.0
    %v691 = vmax.f32 %v563, 0.0
    %v692 = vmax.f32 %v377, 0.0
    %v693 = vmax.f32 %v379, 0.0
    %v694 = vmax.f32 %v568, 0.0
    %v695 = vmax.f32 %v381, 0.0
    %v696 = vmax.f32 %v383, 0.0
    %v697 = vmax.f32 %v571, 0.0
    %v698 = vmax.f32 %v387, 0.0
    %v699 = vmax.f32 %v389, 0.0
    %v700 = vmax.f32 %v576, 0.0
    %v701 = vmax.f32 %v391, 0.0
    %v702 = vmax.f32 %v393, 0.0
    %v703 = vmax.f32 %v579, 0.0
    %v704 = vmax.f32 %v397, 0.0
    %v705 = vmax.f32 %v399, 0.0
    %v706 = vmax.f32 %v584, 0.0
    %v707 = vmax.f32 %v401, 0.0
    %v708 = vmax.f32 %v403, 0.0
    %v709 = vmax.f32 %v587, 0.0
    %v710 = vmax.f32 %v407, 0.0
    %v711 = vmax.f32 %v409, 0.0
    %v712 = vmax.f32 %v592, 0.0
    %v713 = vmax.f32 %v411, 0.0
    %v714 = vmax.f32 %v413, 0.0
    %v715 = vmax.f32 %v595, 0.0
    %v716 = vmax.f32 %v417, 0.0
    %v717 = vmax.f32 %v419, 0.0
    %v718 = vmax.f32 %v600, 0.0
    %v719 = vmax.f32 %v421, 0.0
    %v720 = vmax.f32 %v423, 0.0
    %v721 = vmax.f32 %v603, 0.0
    %v722 = vmax.f32 %v427, 0.0
    %v723 = vmax.f32 %v429, 0.0
    %v724 = vmax.f32 %v608, 0.0
    %v725 = vmax.f32 %v431, 0.0
    %v726 = vmax.f32 %v433, 0.0
    %v727 = vmax.f32 %v611, 0.0
    %v728 = vmax.f32 %v437, 0.0
    %v729 = vmax.f32 %v439, 0.0
    %v730 = vmax.f32 %v616, 0.0
    %v731 = vmax.f32 %v441, 0.0
    %v732 = vmax.f32 %v443, 0.0
    %v733 = vmax.f32 %v619, 0.0
    %v734 = vmax.f32 %v447, 0.0
    %v735 = vmax.f32 %v449, 0.0
    %v736 = vmax.f32 %v624, 0.0
    %v737 = vmax.f32 %v451, 0.0
    %v738 = vmax.f32 %v453, 0.0
    %v739 = vmax.f32 %v627, 0.0
    %v740 = vmax.f32 %v457, 0.0
    %v741 = vmax.f32 %v459, 0.0
    %v742 = vmax.f32 %v632, 0.0
    %v743 = vmax.f32 %v461, 0.0
    %v744 = vmax.f32 %v463, 0.0
    %v745 = vmax.f32 %v635, 0.0
    %v746 = vmax.f32 %v467, 0.0
    %v747 = vmax.f32 %v469, 0.0
    %v748 = vmax.f32 %v640, 0.0
    %v749 = vmax.f32 %v471, 0.0
    %v750 = vmax.f32 %v473, 0.0
    %v751 = vmax.f32 %v643, 0.0
    %v752 = vmax.f32 %v477, 0.0
    %v753 = vmax.f32 %v479, 0.0
    %v754 = vmax.f32 %v648, 0.0
    %v755 = vmax.f32 %v481, 0.0
    %v756 = vmax.f32 %v483, 0.0
    %v757 = vmax.f32 %v651, 0.0
    %v758 = vmax.f32 %v487, 0.0
    %v759 = vmax.f32 %v489, 0.0
    %v760 = vmax.f32 %v656, 0.0
    %v761 = vmax.f32 %v491, 0.0
    %v762 = vmax.f32 %v493, 0.0
    %v763 = vmax.f32 %v659, 0.0
    %v764 = vmax.f32 %v497, 0.0
    %v765 = vmax.f32 %v499, 0.0
    %v766 = vmax.f32 %v664, 0.0
    %v767 = vmax.f32 %v501, 0.0
    %v768 = vmax.f32 %v503, 0.0
    %v769 = vmax.f32 %v667, 0.0
    %v770 = vmax.f32 %v507, 0.0
    %v771 = vmax.f32 %v509, 0.0
    %v772 = vmax.f32 %v672, 0.0
    %v773 = vmax.f32 %v511, 0.0
    %v774 = vmax.f32 %v513, 0.0
    %v775 = vmax.f32 %v675, 0.0
    %v776 = vmax.f32 %v517, 0.0
    %v777 = vmax.f32 %v519, 0.0
    %v778 = vmax.f32 %v680, 0.0
    %v779 = vmax.f32 %v521, 0.0
    %v780 = vmax.f32 %v523, 0.0
    %v781 = vmax.f32 %v683, 0.0
    %v782 = vadd.f32 %v686, %v687
    %v783 = vadd.f32 %v689, %v690
    %v784 = vadd.f32 %v692, %v693
    %v785 = vadd.f32 %v695, %v696
    %v786 = vadd.f32 %v698, %v699
    %v787 = vadd.f32 %v701, %v702
    %v788 = vadd.f32 %v704, %v705
    %v789 = vadd.f32 %v707, %v708
    %v790 = vadd.f32 %v710, %v711
    %v791 = vadd.f32 %v713, %v714
    %v792 = vadd.f32 %v716, %v717
    %v793 = vadd.f32 %v719, %v720
    %v794 = vadd.f32 %v722, %v723
    %v795 = vadd.f32 %v725, %v726
    %v796 = vadd.f32 %v728, %v729
    %v797 = vadd.f32 %v731, %v732
    %v798 = vadd.f32 %v734, %v735
    %v799 = vadd.f32 %v737, %v738
    %v800 = vadd.f32 %v740, %v741
    %v801 = vadd.f32 %v743, %v744
    %v802 = vadd.f32 %v746, %v747
    %v803 = vadd.f32 %v749, %v750
    %v804 = vadd.f32 %v752, %v753
    %v805 = vadd.f32 %v755, %v756
    %v806 = vadd.f32 %v758, %v759
    %v807 = vadd.f32 %v761, %v762
    %v808 = vadd.f32 %v764, %v765
    %v809 = vadd.f32 %v767, %v768
    %v810 = vadd.f32 %v770, %v771
    %v811 = vadd.f32 %v773, %v774
    %v812 = vadd.f32 %v776, %v777
    %v813 = vadd.f32 %v779, %v780
    %v814 = vadd.f32 %v782, %v688
    %v815 = vadd.f32 %v783, %v691
    %v816 = vadd.f32 %v784, %v694
    %v817 = vadd.f32 %v785, %v697
    %v818 = vadd.f32 %v786, %v700
    %v819 = vadd.f32 %v787, %v703
    %v820 = vadd.f32 %v788, %v706
    %v821 = vadd.f32 %v789, %v709
    %v822 = vadd.f32 %v790, %v712
    %v823 = vadd.f32 %v791, %v715
    %v824 = vadd.f32 %v792, %v718
    %v825 = vadd.f32 %v793, %v721
    %v826 = vadd.f32 %v794, %v724
    %v827 = vadd.f32 %v795, %v727
    %v828 = vadd.f32 %v796, %v730
    %v829 = vadd.f32 %v797, %v733
    %v830 = vadd.f32 %v798, %v736
    %v831 = vadd.f32 %v799, %v739
    %v832 = vadd.f32 %v800, %v742
    %v833 = vadd.f32 %v801, %v745
    %v834 = vadd.f32 %v802, %v748
    %v835 = vadd.f32 %v803, %v751
    %v836 = vadd.f32 %v804, %v754
    %v837 = vadd.f32 %v805, %v757
    %v838 = vadd.f32 %v806, %v760
    %v839 = vadd.f32 %v807, %v763
    %v840 = vadd.f32 %v808, %v766
    %v841 = vadd.f32 %v809, %v769
    %v842 = vadd.f32 %v810, %v772
    %v843 = vadd.f32 %v811, %v775
    %v844 = vadd.f32 %v812, %v778
    %v845 = vadd.f32 %v813, %v781
    %v846 = vld [vmem:[#allocation2] sm:$0x3]
    %v847 = vadd.f32 %v814, %v815
    %v848 = vadd.f32 %v847, %v816
    %v849 = vadd.f32 %v848, %v817
    %v850 = vadd.f32 %v849, %v818
    %v851 = vadd.f32 %v850, %v819
    %v852 = vadd.f32 %v851, %v820
    %v853 = vadd.f32 %v852, %v821
    %v854 = vadd.f32 %v853, %v822
    %v855 = vadd.f32 %v854, %v823
    %v856 = vadd.f32 %v855, %v824
    %v857 = vadd.f32 %v856, %v825
    %v858 = vadd.f32 %v857, %v826
    %v859 = vadd.f32 %v858, %v827
    %v860 = vadd.f32 %v859, %v828
    %v861 = vadd.f32 %v860, %v829
    %v862 = vrot.slane %v861, 4
    %v863 = vadd.f32 %v861, %v862
    %v864 = vrot.slane %v863, 2
    %v865 = vadd.f32 %v863, %v864
    %v866 = vrot.slane %v865, 1
    %v867 = vadd.f32 %v865, %v866
    %v868 = vadd.f32 %v830, %v831
    %v869 = vadd.f32 %v868, %v832
    %v870 = vadd.f32 %v869, %v833
    %v871 = vadd.f32 %v870, %v834
    %v872 = vadd.f32 %v871, %v835
    %v873 = vadd.f32 %v872, %v836
    %v874 = vadd.f32 %v873, %v837
    %v875 = vadd.f32 %v874, %v838
    %v876 = vadd.f32 %v875, %v839
    %v877 = vadd.f32 %v876, %v840
    %v878 = vadd.f32 %v877, %v841
    %v879 = vadd.f32 %v878, %v842
    %v880 = vadd.f32 %v879, %v843
    %v881 = vadd.f32 %v880, %v844
    %v882 = vadd.f32 %v881, %v845
    %v883 = vrot.slane %v882, 4
    %v884 = vadd.f32 %v882, %v883
    %v885 = vrot.slane %v884, 2
    %v886 = vadd.f32 %v884, %v885
    %v887 = vrot.slane %v886, 1
    %v888 = vadd.f32 %v886, %v887
    %vm891 = vcmask 1041409
    %v892 = vsel %vm891, %v888, %v867
    %v894 = vadd.f32 %v846, %v892
    %895 = vst [vmem:[#allocation2] sm:$0x3] %v894
    %s896 = scalar_lea.vmem %s0, 64
    %v897 = vld [vmem:[%s896] sm:$0xf]
    %v898 = vld [vmem:[%s896 + $0x4] sm:$0xf]
    %v899 = vld [vmem:[%s896 + $0x8] sm:$0xf]
    %v900 = vld [vmem:[%s896 + $0xc] sm:$0xf]
    %v901 = vld [vmem:[%s896 + $0x10] sm:$0xf]
    %v902 = vld [vmem:[%s896 + $0x14] sm:$0xf]
    %v903 = vld [vmem:[%s896 + $0x18] sm:$0xf]
    %v904 = vld [vmem:[%s896 + $0x1c] sm:$0xf]
    %v905 = vld [vmem:[%s896 + $0x20] sm:$0xf]
    %v906 = vld [vmem:[%s896 + $0x24] sm:$0xf]
    %v907 = vld [vmem:[%s896 + $0x28] sm:$0xf]
    %v908 = vld [vmem:[%s896 + $0x2c] sm:$0xf]
    %v909 = vld [vmem:[%s896 + $0x30] sm:$0xf]
    %v910 = vld [vmem:[%s896 + $0x34] sm:$0xf]
    %v911 = vld [vmem:[%s896 + $0x38] sm:$0xf]
    %v912 = vld [vmem:[%s896 + $0x3c] sm:$0xf]
    %v913 = vld [vmem:[%s896 + $0x80] sm:$0xf]
    %v914 = vld [vmem:[%s896 + $0x84] sm:$0xf]
    %v915 = vld [vmem:[%s896 + $0x88] sm:$0xf]
    %v916 = vld [vmem:[%s896 + $0x8c] sm:$0xf]
    %v917 = vld [vmem:[%s896 + $0x90] sm:$0xf]
    %v918 = vld [vmem:[%s896 + $0x94] sm:$0xf]
    %v919 = vld [vmem:[%s896 + $0x98] sm:$0xf]
    %v920 = vld [vmem:[%s896 + $0x9c] sm:$0xf]
    %v921 = vld [vmem:[%s896 + $0xa0] sm:$0xf]
    %v922 = vld [vmem:[%s896 + $0xa4] sm:$0xf]
    %v923 = vld [vmem:[%s896 + $0xa8] sm:$0xf]
    %v924 = vld [vmem:[%s896 + $0xac] sm:$0xf]
    %v925 = vld [vmem:[%s896 + $0xb0] sm:$0xf]
    %v926 = vld [vmem:[%s896 + $0xb4] sm:$0xf]
    %v927 = vld [vmem:[%s896 + $0xb8] sm:$0xf]
    %v928 = vld [vmem:[%s896 + $0xbc] sm:$0xf]
    %v961 = vunpack.c.l.b16 %v897
    %v962 = vunpack.c.l.b16 %v898
    %v963 = vunpack.c.l.b16 %v899
    %v964 = vunpack.c.l.b16 %v900
    %v965 = vunpack.c.l.b16 %v901
    %v966 = vunpack.c.l.b16 %v902
    %v967 = vunpack.c.l.b16 %v903
    %v968 = vunpack.c.l.b16 %v904
    %v969 = vunpack.c.l.b16 %v905
    %v970 = vunpack.c.l.b16 %v906
    %v971 = vunpack.c.l.b16 %v907
    %v972 = vunpack.c.l.b16 %v908
    %v973 = vunpack.c.l.b16 %v909
    %v974 = vunpack.c.l.b16 %v910
    %v975 = vunpack.c.l.b16 %v911
    %v976 = vunpack.c.l.b16 %v912
    %v977 = vunpack.c.l.b16 %v913
    %v978 = vunpack.c.l.b16 %v914
    %v979 = vunpack.c.l.b16 %v915
    %v980 = vunpack.c.l.b16 %v916
    %v981 = vunpack.c.l.b16 %v917
    %v982 = vunpack.c.l.b16 %v918
    %v983 = vunpack.c.l.b16 %v919
    %v984 = vunpack.c.l.b16 %v920
    %v985 = vunpack.c.l.b16 %v921
    %v986 = vunpack.c.l.b16 %v922
    %v987 = vunpack.c.l.b16 %v923
    %v988 = vunpack.c.l.b16 %v924
    %v989 = vunpack.c.l.b16 %v925
    %v990 = vunpack.c.l.b16 %v926
    %v991 = vunpack.c.l.b16 %v927
    %v992 = vunpack.c.l.b16 %v928
    %v993 = vpack.c.b16 %v962, %v961
    %v994 = vpack.c.b16 %v964, %v963
    %v995 = vpack.c.b16 %v966, %v965
    %v996 = vpack.c.b16 %v968, %v967
    %v997 = vpack.c.b16 %v970, %v969
    %v998 = vpack.c.b16 %v972, %v971
    %v999 = vpack.c.b16 %v974, %v973
    %v1000 = vpack.c.b16 %v976, %v975
    %v1001 = vpack.c.b16 %v978, %v977
    %v1002 = vpack.c.b16 %v980, %v979
    %v1003 = vpack.c.b16 %v982, %v981
    %v1004 = vpack.c.b16 %v984, %v983
    %v1005 = vpack.c.b16 %v986, %v985
    %v1006 = vpack.c.b16 %v988, %v987
    %v1007 = vpack.c.b16 %v990, %v989
    %v1008 = vpack.c.b16 %v992, %v991
    %1025 = vmatprep.subr.bf16.mxu0 %v306
    %1026 = vmatpush1.bf16.msra.mxu0 %v305
    %1027 = vmatprep.subr.bf16.mxu0 %v303
    %1028 = vmatpush1.bf16.msra.mxu0 %v302
    %1029 = vmatprep.subr.bf16.mxu0 %v300
    %1030 = vmatpush1.bf16.msra.mxu0 %v299
    %1031 = vmatprep.subr.bf16.mxu0 %v297
    %1032 = vmatpush1.bf16.msra.mxu0 %v296
    %1033 = vmatprep.subr.bf16.mxu0 %v294
    %1034 = vmatpush1.bf16.msra.mxu0 %v293
    %1035 = vmatprep.subr.bf16.mxu0 %v291
    %1036 = vmatpush1.bf16.msra.mxu0 %v290
    %1037 = vmatprep.subr.bf16.mxu0 %v288
    %1038 = vmatpush1.bf16.msra.mxu0 %v287
    %1039 = vmatprep.subr.bf16.mxu0 %v285
    %1040 = vmatpush1.bf16.msra.mxu0 %v284
    %1041 = vmatprep.subr.bf16.mxu0 0
    %1042 = vmatpush2.bf16.msra.mxu0 0
    %1043 = vmatprep.subr.bf16.mxu0 0
    %1044 = vmatpush2.bf16.msra.mxu0 0
    %1045 = vmatprep.subr.bf16.mxu0 0
    %1046 = vmatpush2.bf16.msra.mxu0 0
    %1047 = vmatprep.subr.bf16.mxu0 0
    %1048 = vmatpush2.bf16.msra.mxu0 0
    %1049 = vmatprep.subr.bf16.mxu0 0
    %1050 = vmatpush2.bf16.msra.mxu0 0
    %1051 = vmatprep.subr.bf16.mxu0 0
    %1052 = vmatpush2.bf16.msra.mxu0 0
    %1053 = vmatprep.subr.bf16.mxu0 0
    %1054 = vmatpush2.bf16.msra.mxu0 0
    %1055 = vmatprep.subr.bf16.mxu0 0
    %1056 = vmatpush2.bf16.msra.mxu0 0
    %1057 = vmatprep.mubr.bf16.mxu0 0
    %1058 = vmatmul.mubr.bf16.gmra.mxu0 %v993
    %v1059 = vpop.f32.mrf.mxu0
    %v1060 = vadd.f32 %v96, %v1059
    %v1061 = vpop.f32.mrf.mxu0
    %v1062 = vadd.f32 %v100, %v1061
    %v1063 = vpop.f32.mrf.mxu0
    %v1064 = vadd.f32 %v96, %v1063
    %v1065 = vpop.f32.mrf.mxu0
    %v1066 = vadd.f32 %v100, %v1065
    %1067 = vmatprep.mubr.bf16.mxu0 0
    %1068 = vmatmul.mubr.bf16.gmra.mxu0 %v994
    %v1069 = vpop.f32.mrf.mxu0
    %v1070 = vadd.f32 %v96, %v1069
    %v1071 = vpop.f32.mrf.mxu0
    %v1072 = vadd.f32 %v100, %v1071
    %v1073 = vpop.f32.mrf.mxu0
    %v1074 = vadd.f32 %v96, %v1073
    %v1075 = vpop.f32.mrf.mxu0
    %v1076 = vadd.f32 %v100, %v1075
    %1077 = vmatprep.mubr.bf16.mxu0 0
    %1078 = vmatmul.mubr.bf16.gmra.mxu0 %v995
    %v1079 = vpop.f32.mrf.mxu0
    %v1080 = vadd.f32 %v96, %v1079
    %v1081 = vpop.f32.mrf.mxu0
    %v1082 = vadd.f32 %v100, %v1081
    %v1083 = vpop.f32.mrf.mxu0
    %v1084 = vadd.f32 %v96, %v1083
    %v1085 = vpop.f32.mrf.mxu0
    %v1086 = vadd.f32 %v100, %v1085
    %1087 = vmatprep.mubr.bf16.mxu0 0
    %1088 = vmatmul.mubr.bf16.gmra.mxu0 %v996
    %v1089 = vpop.f32.mrf.mxu0
    %v1090 = vadd.f32 %v96, %v1089
    %v1091 = vpop.f32.mrf.mxu0
    %v1092 = vadd.f32 %v100, %v1091
    %v1093 = vpop.f32.mrf.mxu0
    %v1094 = vadd.f32 %v96, %v1093
    %v1095 = vpop.f32.mrf.mxu0
    %v1096 = vadd.f32 %v100, %v1095
    %1097 = vmatprep.mubr.bf16.mxu0 0
    %1098 = vmatmul.mubr.bf16.gmra.mxu0 %v997
    %v1099 = vpop.f32.mrf.mxu0
    %v1100 = vadd.f32 %v96, %v1099
    %v1101 = vpop.f32.mrf.mxu0
    %v1102 = vadd.f32 %v100, %v1101
    %v1103 = vpop.f32.mrf.mxu0
    %v1104 = vadd.f32 %v96, %v1103
    %v1105 = vpop.f32.mrf.mxu0
    %v1106 = vadd.f32 %v100, %v1105
    %1107 = vmatprep.mubr.bf16.mxu0 0
    %1108 = vmatmul.mubr.bf16.gmra.mxu0 %v998
    %v1109 = vpop.f32.mrf.mxu0
    %v1110 = vadd.f32 %v96, %v1109
    %v1111 = vpop.f32.mrf.mxu0
    %v1112 = vadd.f32 %v100, %v1111
    %v1113 = vpop.f32.mrf.mxu0
    %v1114 = vadd.f32 %v96, %v1113
    %v1115 = vpop.f32.mrf.mxu0
    %v1116 = vadd.f32 %v100, %v1115
    %1117 = vmatprep.mubr.bf16.mxu0 0
    %1118 = vmatmul.mubr.bf16.gmra.mxu0 %v999
    %v1119 = vpop.f32.mrf.mxu0
    %v1120 = vadd.f32 %v96, %v1119
    %v1121 = vpop.f32.mrf.mxu0
    %v1122 = vadd.f32 %v100, %v1121
    %v1123 = vpop.f32.mrf.mxu0
    %v1124 = vadd.f32 %v96, %v1123
    %v1125 = vpop.f32.mrf.mxu0
    %v1126 = vadd.f32 %v100, %v1125
    %1127 = vmatprep.mubr.bf16.mxu0 0
    %1128 = vmatmul.mubr.bf16.gmra.mxu0 %v1000
    %v1129 = vpop.f32.mrf.mxu0
    %v1130 = vadd.f32 %v96, %v1129
    %v1131 = vpop.f32.mrf.mxu0
    %v1132 = vadd.f32 %v100, %v1131
    %v1133 = vpop.f32.mrf.mxu0
    %v1134 = vadd.f32 %v96, %v1133
    %v1135 = vpop.f32.mrf.mxu0
    %v1136 = vadd.f32 %v100, %v1135
    %1137 = vmatprep.mubr.bf16.mxu0 0
    %1138 = vmatmul.mubr.bf16.gmra.mxu0 %v1001
    %v1139 = vpop.f32.mrf.mxu0
    %v1140 = vadd.f32 %v96, %v1139
    %v1141 = vpop.f32.mrf.mxu0
    %v1142 = vadd.f32 %v100, %v1141
    %v1143 = vpop.f32.mrf.mxu0
    %v1144 = vadd.f32 %v96, %v1143
    %v1145 = vpop.f32.mrf.mxu0
    %v1146 = vadd.f32 %v100, %v1145
    %1147 = vmatprep.mubr.bf16.mxu0 0
    %1148 = vmatmul.mubr.bf16.gmra.mxu0 %v1002
    %v1149 = vpop.f32.mrf.mxu0
    %v1150 = vadd.f32 %v96, %v1149
    %v1151 = vpop.f32.mrf.mxu0
    %v1152 = vadd.f32 %v100, %v1151
    %v1153 = vpop.f32.mrf.mxu0
    %v1154 = vadd.f32 %v96, %v1153
    %v1155 = vpop.f32.mrf.mxu0
    %v1156 = vadd.f32 %v100, %v1155
    %1157 = vmatprep.mubr.bf16.mxu0 0
    %1158 = vmatmul.mubr.bf16.gmra.mxu0 %v1003
    %v1159 = vpop.f32.mrf.mxu0
    %v1160 = vadd.f32 %v96, %v1159
    %v1161 = vpop.f32.mrf.mxu0
    %v1162 = vadd.f32 %v100, %v1161
    %v1163 = vpop.f32.mrf.mxu0
    %v1164 = vadd.f32 %v96, %v1163
    %v1165 = vpop.f32.mrf.mxu0
    %v1166 = vadd.f32 %v100, %v1165
    %1167 = vmatprep.mubr.bf16.mxu0 0
    %1168 = vmatmul.mubr.bf16.gmra.mxu0 %v1004
    %v1169 = vpop.f32.mrf.mxu0
    %v1170 = vadd.f32 %v96, %v1169
    %v1171 = vpop.f32.mrf.mxu0
    %v1172 = vadd.f32 %v100, %v1171
    %v1173 = vpop.f32.mrf.mxu0
    %v1174 = vadd.f32 %v96, %v1173
    %v1175 = vpop.f32.mrf.mxu0
    %v1176 = vadd.f32 %v100, %v1175
    %1177 = vmatprep.mubr.bf16.mxu0 0
    %1178 = vmatmul.mubr.bf16.gmra.mxu0 %v1005
    %v1179 = vpop.f32.mrf.mxu0
    %v1180 = vadd.f32 %v96, %v1179
    %v1181 = vpop.f32.mrf.mxu0
    %v1182 = vadd.f32 %v100, %v1181
    %v1183 = vpop.f32.mrf.mxu0
    %v1184 = vadd.f32 %v96, %v1183
    %v1185 = vpop.f32.mrf.mxu0
    %v1186 = vadd.f32 %v100, %v1185
    %1187 = vmatprep.mubr.bf16.mxu0 0
    %1188 = vmatmul.mubr.bf16.gmra.mxu0 %v1006
    %v1189 = vpop.f32.mrf.mxu0
    %v1190 = vadd.f32 %v96, %v1189
    %v1191 = vpop.f32.mrf.mxu0
    %v1192 = vadd.f32 %v100, %v1191
    %v1193 = vpop.f32.mrf.mxu0
    %v1194 = vadd.f32 %v96, %v1193
    %v1195 = vpop.f32.mrf.mxu0
    %v1196 = vadd.f32 %v100, %v1195
    %1197 = vmatprep.mubr.bf16.mxu0 0
    %1198 = vmatmul.mubr.bf16.gmra.mxu0 %v1007
    %v1199 = vpop.f32.mrf.mxu0
    %v1200 = vadd.f32 %v96, %v1199
    %v1201 = vpop.f32.mrf.mxu0
    %v1202 = vadd.f32 %v100, %v1201
    %v1203 = vpop.f32.mrf.mxu0
    %v1204 = vadd.f32 %v96, %v1203
    %v1205 = vpop.f32.mrf.mxu0
    %v1206 = vadd.f32 %v100, %v1205
    %1207 = vmatprep.mubr.bf16.mxu0 0
    %1208 = vmatmul.mubr.bf16.gmra.mxu0 %v1008
    %v1209 = vpop.f32.mrf.mxu0
    %v1210 = vadd.f32 %v96, %v1209
    %v1211 = vpop.f32.mrf.mxu0
    %v1212 = vadd.f32 %v100, %v1211
    %v1213 = vpop.f32.mrf.mxu0
    %v1214 = vadd.f32 %v96, %v1213
    %v1215 = vpop.f32.mrf.mxu0
    %v1216 = vadd.f32 %v100, %v1215
    %1217 = vdwg.mxu0
    %1218 = vmatprep.subr.bf16.mxu0 0
    %1219 = vmatpush1.bf16.msra.mxu0 %v307
    %1220 = vmatprep.subr.bf16.mxu0 0
    %1221 = vmatpush1.bf16.msra.mxu0 %v304
    %1222 = vmatprep.subr.bf16.mxu0 0
    %1223 = vmatpush1.bf16.msra.mxu0 %v301
    %1224 = vmatprep.subr.bf16.mxu0 0
    %1225 = vmatpush1.bf16.msra.mxu0 %v298
    %1226 = vmatprep.subr.bf16.mxu0 0
    %1227 = vmatpush1.bf16.msra.mxu0 %v295
    %1228 = vmatprep.subr.bf16.mxu0 0
    %1229 = vmatpush1.bf16.msra.mxu0 %v292
    %1230 = vmatprep.subr.bf16.mxu0 0
    %1231 = vmatpush1.bf16.msra.mxu0 %v289
    %1232 = vmatprep.subr.bf16.mxu0 0
    %1233 = vmatpush1.bf16.msra.mxu0 %v286
    %1234 = vmatprep.subr.bf16.mxu0 0
    %1235 = vmatpush2.bf16.msra.mxu0 0
    %1236 = vmatprep.subr.bf16.mxu0 0
    %1237 = vmatpush2.bf16.msra.mxu0 0
    %1238 = vmatprep.subr.bf16.mxu0 0
    %1239 = vmatpush2.bf16.msra.mxu0 0
    %1240 = vmatprep.subr.bf16.mxu0 0
    %1241 = vmatpush2.bf16.msra.mxu0 0
    %1242 = vmatprep.subr.bf16.mxu0 0
    %1243 = vmatpush2.bf16.msra.mxu0 0
    %1244 = vmatprep.subr.bf16.mxu0 0
    %1245 = vmatpush2.bf16.msra.mxu0 0
    %1246 = vmatprep.subr.bf16.mxu0 0
    %1247 = vmatpush2.bf16.msra.mxu0 0
    %1248 = vmatprep.subr.bf16.mxu0 0
    %1249 = vmatpush2.bf16.msra.mxu0 0
    %1250 = vmatprep.mubr.bf16.mxu0 0
    %1251 = vmatmul.mubr.bf16.gmra.mxu0 %v993
    %v1252 = vpop.f32.mrf.mxu0
    %v1253 = vadd.f32 %v104, %v1252
    %v1254 = vpop.f32.mrf.mxu0
    %v1255 = vpop.f32.mrf.mxu0
    %v1256 = vadd.f32 %v104, %v1255
    %v1257 = vpop.f32.mrf.mxu0
    %1258 = vmatprep.mubr.bf16.mxu0 0
    %1259 = vmatmul.mubr.bf16.gmra.mxu0 %v994
    %v1260 = vpop.f32.mrf.mxu0
    %v1261 = vadd.f32 %v104, %v1260
    %v1262 = vpop.f32.mrf.mxu0
    %v1263 = vpop.f32.mrf.mxu0
    %v1264 = vadd.f32 %v104, %v1263
    %v1265 = vpop.f32.mrf.mxu0
    %1266 = vmatprep.mubr.bf16.mxu0 0
    %1267 = vmatmul.mubr.bf16.gmra.mxu0 %v995
    %v1268 = vpop.f32.mrf.mxu0
    %v1269 = vadd.f32 %v104, %v1268
    %v1270 = vpop.f32.mrf.mxu0
    %v1271 = vpop.f32.mrf.mxu0
    %v1272 = vadd.f32 %v104, %v1271
    %v1273 = vpop.f32.mrf.mxu0
    %1274 = vmatprep.mubr.bf16.mxu0 0
    %1275 = vmatmul.mubr.bf16.gmra.mxu0 %v996
    %v1276 = vpop.f32.mrf.mxu0
    %v1277 = vadd.f32 %v104, %v1276
    %v1278 = vpop.f32.mrf.mxu0
    %v1279 = vpop.f32.mrf.mxu0
    %v1280 = vadd.f32 %v104, %v1279
    %v1281 = vpop.f32.mrf.mxu0
    %1282 = vmatprep.mubr.bf16.mxu0 0
    %1283 = vmatmul.mubr.bf16.gmra.mxu0 %v997
    %v1284 = vpop.f32.mrf.mxu0
    %v1285 = vadd.f32 %v104, %v1284
    %v1286 = vpop.f32.mrf.mxu0
    %v1287 = vpop.f32.mrf.mxu0
    %v1288 = vadd.f32 %v104, %v1287
    %v1289 = vpop.f32.mrf.mxu0
    %1290 = vmatprep.mubr.bf16.mxu0 0
    %1291 = vmatmul.mubr.bf16.gmra.mxu0 %v998
    %v1292 = vpop.f32.mrf.mxu0
    %v1293 = vadd.f32 %v104, %v1292
    %v1294 = vpop.f32.mrf.mxu0
    %v1295 = vpop.f32.mrf.mxu0
    %v1296 = vadd.f32 %v104, %v1295
    %v1297 = vpop.f32.mrf.mxu0
    %1298 = vmatprep.mubr.bf16.mxu0 0
    %1299 = vmatmul.mubr.bf16.gmra.mxu0 %v999
    %v1300 = vpop.f32.mrf.mxu0
    %v1301 = vadd.f32 %v104, %v1300
    %v1302 = vpop.f32.mrf.mxu0
    %v1303 = vpop.f32.mrf.mxu0
    %v1304 = vadd.f32 %v104, %v1303
    %v1305 = vpop.f32.mrf.mxu0
    %1306 = vmatprep.mubr.bf16.mxu0 0
    %1307 = vmatmul.mubr.bf16.gmra.mxu0 %v1000
    %v1308 = vpop.f32.mrf.mxu0
    %v1309 = vadd.f32 %v104, %v1308
    %v1310 = vpop.f32.mrf.mxu0
    %v1311 = vpop.f32.mrf.mxu0
    %v1312 = vadd.f32 %v104, %v1311
    %v1313 = vpop.f32.mrf.mxu0
    %1314 = vmatprep.mubr.bf16.mxu0 0
    %1315 = vmatmul.mubr.bf16.gmra.mxu0 %v1001
    %v1316 = vpop.f32.mrf.mxu0
    %v1317 = vadd.f32 %v104, %v1316
    %v1318 = vpop.f32.mrf.mxu0
    %v1319 = vpop.f32.mrf.mxu0
    %v1320 = vadd.f32 %v104, %v1319
    %v1321 = vpop.f32.mrf.mxu0
    %1322 = vmatprep.mubr.bf16.mxu0 0
    %1323 = vmatmul.mubr.bf16.gmra.mxu0 %v1002
    %v1324 = vpop.f32.mrf.mxu0
    %v1325 = vadd.f32 %v104, %v1324
    %v1326 = vpop.f32.mrf.mxu0
    %v1327 = vpop.f32.mrf.mxu0
    %v1328 = vadd.f32 %v104, %v1327
    %v1329 = vpop.f32.mrf.mxu0
    %1330 = vmatprep.mubr.bf16.mxu0 0
    %1331 = vmatmul.mubr.bf16.gmra.mxu0 %v1003
    %v1332 = vpop.f32.mrf.mxu0
    %v1333 = vadd.f32 %v104, %v1332
    %v1334 = vpop.f32.mrf.mxu0
    %v1335 = vpop.f32.mrf.mxu0
    %v1336 = vadd.f32 %v104, %v1335
    %v1337 = vpop.f32.mrf.mxu0
    %1338 = vmatprep.mubr.bf16.mxu0 0
    %1339 = vmatmul.mubr.bf16.gmra.mxu0 %v1004
    %v1340 = vpop.f32.mrf.mxu0
    %v1341 = vadd.f32 %v104, %v1340
    %v1342 = vpop.f32.mrf.mxu0
    %v1343 = vpop.f32.mrf.mxu0
    %v1344 = vadd.f32 %v104, %v1343
    %v1345 = vpop.f32.mrf.mxu0
    %1346 = vmatprep.mubr.bf16.mxu0 0
    %1347 = vmatmul.mubr.bf16.gmra.mxu0 %v1005
    %v1348 = vpop.f32.mrf.mxu0
    %v1349 = vadd.f32 %v104, %v1348
    %v1350 = vpop.f32.mrf.mxu0
    %v1351 = vpop.f32.mrf.mxu0
    %v1352 = vadd.f32 %v104, %v1351
    %v1353 = vpop.f32.mrf.mxu0
    %1354 = vmatprep.mubr.bf16.mxu0 0
    %1355 = vmatmul.mubr.bf16.gmra.mxu0 %v1006
    %v1356 = vpop.f32.mrf.mxu0
    %v1357 = vadd.f32 %v104, %v1356
    %v1358 = vpop.f32.mrf.mxu0
    %v1359 = vpop.f32.mrf.mxu0
    %v1360 = vadd.f32 %v104, %v1359
    %v1361 = vpop.f32.mrf.mxu0
    %1362 = vmatprep.mubr.bf16.mxu0 0
    %1363 = vmatmul.mubr.bf16.gmra.mxu0 %v1007
    %v1364 = vpop.f32.mrf.mxu0
    %v1365 = vadd.f32 %v104, %v1364
    %v1366 = vpop.f32.mrf.mxu0
    %v1367 = vpop.f32.mrf.mxu0
    %v1368 = vadd.f32 %v104, %v1367
    %v1369 = vpop.f32.mrf.mxu0
    %1370 = vmatprep.mubr.bf16.mxu0 0
    %1371 = vmatmul.mubr.bf16.gmra.mxu0 %v1008
    %v1372 = vpop.f32.mrf.mxu0
    %v1373 = vadd.f32 %v104, %v1372
    %v1374 = vpop.f32.mrf.mxu0
    %v1375 = vpop.f32.mrf.mxu0
    %v1376 = vadd.f32 %v104, %v1375
    %v1377 = vpop.f32.mrf.mxu0
    %1378 = vdwg.mxu0
    %v1379 = vmax.f32 %v1060, 0.0
    %v1380 = vmax.f32 %v1062, 0.0
    %v1381 = vmax.f32 %v1253, 0.0
    %v1382 = vmax.f32 %v1064, 0.0
    %v1383 = vmax.f32 %v1066, 0.0
    %v1384 = vmax.f32 %v1256, 0.0
    %v1385 = vmax.f32 %v1070, 0.0
    %v1386 = vmax.f32 %v1072, 0.0
    %v1387 = vmax.f32 %v1261, 0.0
    %v1388 = vmax.f32 %v1074, 0.0
    %v1389 = vmax.f32 %v1076, 0.0
    %v1390 = vmax.f32 %v1264, 0.0
    %v1391 = vmax.f32 %v1080, 0.0
    %v1392 = vmax.f32 %v1082, 0.0
    %v1393 = vmax.f32 %v1269, 0.0
    %v1394 = vmax.f32 %v1084, 0.0
    %v1395 = vmax.f32 %v1086, 0.0
    %v1396 = vmax.f32 %v1272, 0.0
    %v1397 = vmax.f32 %v1090, 0.0
    %v1398 = vmax.f32 %v1092, 0.0
    %v1399 = vmax.f32 %v1277, 0.0
    %v1400 = vmax.f32 %v1094, 0.0
    %v1401 = vmax.f32 %v1096, 0.0
    %v1402 = vmax.f32 %v1280, 0.0
    %v1403 = vmax.f32 %v1100, 0.0
    %v1404 = vmax.f32 %v1102, 0.0
    %v1405 = vmax.f32 %v1285, 0.0
    %v1406 = vmax.f32 %v1104, 0.0
    %v1407 = vmax.f32 %v1106, 0.0
    %v1408 = vmax.f32 %v1288, 0.0
    %v1409 = vmax.f32 %v1110, 0.0
    %v1410 = vmax.f32 %v1112, 0.0
    %v1411 = vmax.f32 %v1293, 0.0
    %v1412 = vmax.f32 %v1114, 0.0
    %v1413 = vmax.f32 %v1116, 0.0
    %v1414 = vmax.f32 %v1296, 0.0
    %v1415 = vmax.f32 %v1120, 0.0
    %v1416 = vmax.f32 %v1122, 0.0
    %v1417 = vmax.f32 %v1301, 0.0
    %v1418 = vmax.f32 %v1124, 0.0
    %v1419 = vmax.f32 %v1126, 0.0
    %v1420 = vmax.f32 %v1304, 0.0
    %v1421 = vmax.f32 %v1130, 0.0
    %v1422 = vmax.f32 %v1132, 0.0
    %v1423 = vmax.f32 %v1309, 0.0
    %v1424 = vmax.f32 %v1134, 0.0
    %v1425 = vmax.f32 %v1136, 0.0
    %v1426 = vmax.f32 %v1312, 0.0
    %v1427 = vmax.f32 %v1140, 0.0
    %v1428 = vmax.f32 %v1142, 0.0
    %v1429 = vmax.f32 %v1317, 0.0
    %v1430 = vmax.f32 %v1144, 0.0
    %v1431 = vmax.f32 %v1146, 0.0
    %v1432 = vmax.f32 %v1320, 0.0
    %v1433 = vmax.f32 %v1150, 0.0
    %v1434 = vmax.f32 %v1152, 0.0
    %v1435 = vmax.f32 %v1325, 0.0
    %v1436 = vmax.f32 %v1154, 0.0
    %v1437 = vmax.f32 %v1156, 0.0
    %v1438 = vmax.f32 %v1328, 0.0
    %v1439 = vmax.f32 %v1160, 0.0
    %v1440 = vmax.f32 %v1162, 0.0
    %v1441 = vmax.f32 %v1333, 0.0
    %v1442 = vmax.f32 %v1164, 0.0
    %v1443 = vmax.f32 %v1166, 0.0
    %v1444 = vmax.f32 %v1336, 0.0
    %v1445 = vmax.f32 %v1170, 0.0
    %v1446 = vmax.f32 %v1172, 0.0
    %v1447 = vmax.f32 %v1341, 0.0
    %v1448 = vmax.f32 %v1174, 0.0
    %v1449 = vmax.f32 %v1176, 0.0
    %v1450 = vmax.f32 %v1344, 0.0
    %v1451 = vmax.f32 %v1180, 0.0
    %v1452 = vmax.f32 %v1182, 0.0
    %v1453 = vmax.f32 %v1349, 0.0
    %v1454 = vmax.f32 %v1184, 0.0
    %v1455 = vmax.f32 %v1186, 0.0
    %v1456 = vmax.f32 %v1352, 0.0
    %v1457 = vmax.f32 %v1190, 0.0
    %v1458 = vmax.f32 %v1192, 0.0
    %v1459 = vmax.f32 %v1357, 0.0
    %v1460 = vmax.f32 %v1194, 0.0
    %v1461 = vmax.f32 %v1196, 0.0
    %v1462 = vmax.f32 %v1360, 0.0
    %v1463 = vmax.f32 %v1200, 0.0
    %v1464 = vmax.f32 %v1202, 0.0
    %v1465 = vmax.f32 %v1365, 0.0
    %v1466 = vmax.f32 %v1204, 0.0
    %v1467 = vmax.f32 %v1206, 0.0
    %v1468 = vmax.f32 %v1368, 0.0
    %v1469 = vmax.f32 %v1210, 0.0
    %v1470 = vmax.f32 %v1212, 0.0
    %v1471 = vmax.f32 %v1373, 0.0
    %v1472 = vmax.f32 %v1214, 0.0
    %v1473 = vmax.f32 %v1216, 0.0
    %v1474 = vmax.f32 %v1376, 0.0
    %v1475 = vadd.f32 %v1379, %v1380
    %v1476 = vadd.f32 %v1382, %v1383
    %v1477 = vadd.f32 %v1385, %v1386
    %v1478 = vadd.f32 %v1388, %v1389
    %v1479 = vadd.f32 %v1391, %v1392
    %v1480 = vadd.f32 %v1394, %v1395
    %v1481 = vadd.f32 %v1397, %v1398
    %v1482 = vadd.f32 %v1400, %v1401
    %v1483 = vadd.f32 %v1403, %v1404
    %v1484 = vadd.f32 %v1406, %v1407
    %v1485 = vadd.f32 %v1409, %v1410
    %v1486 = vadd.f32 %v1412, %v1413
    %v1487 = vadd.f32 %v1415, %v1416
    %v1488 = vadd.f32 %v1418, %v1419
    %v1489 = vadd.f32 %v1421, %v1422
    %v1490 = vadd.f32 %v1424, %v1425
    %v1491 = vadd.f32 %v1427, %v1428
    %v1492 = vadd.f32 %v1430, %v1431
    %v1493 = vadd.f32 %v1433, %v1434
    %v1494 = vadd.f32 %v1436, %v1437
    %v1495 = vadd.f32 %v1439, %v1440
    %v1496 = vadd.f32 %v1442, %v1443
    %v1497 = vadd.f32 %v1445, %v1446
    %v1498 = vadd.f32 %v1448, %v1449
    %v1499 = vadd.f32 %v1451, %v1452
    %v1500 = vadd.f32 %v1454, %v1455
    %v1501 = vadd.f32 %v1457, %v1458
    %v1502 = vadd.f32 %v1460, %v1461
    %v1503 = vadd.f32 %v1463, %v1464
    %v1504 = vadd.f32 %v1466, %v1467
    %v1505 = vadd.f32 %v1469, %v1470
    %v1506 = vadd.f32 %v1472, %v1473
    %v1507 = vadd.f32 %v1475, %v1381
    %v1508 = vadd.f32 %v1476, %v1384
    %v1509 = vadd.f32 %v1477, %v1387
    %v1510 = vadd.f32 %v1478, %v1390
    %v1511 = vadd.f32 %v1479, %v1393
    %v1512 = vadd.f32 %v1480, %v1396
    %v1513 = vadd.f32 %v1481, %v1399
    %v1514 = vadd.f32 %v1482, %v1402
    %v1515 = vadd.f32 %v1483, %v1405
    %v1516 = vadd.f32 %v1484, %v1408
    %v1517 = vadd.f32 %v1485, %v1411
    %v1518 = vadd.f32 %v1486, %v1414
    %v1519 = vadd.f32 %v1487, %v1417
    %v1520 = vadd.f32 %v1488, %v1420
    %v1521 = vadd.f32 %v1489, %v1423
    %v1522 = vadd.f32 %v1490, %v1426
    %v1523 = vadd.f32 %v1491, %v1429
    %v1524 = vadd.f32 %v1492, %v1432
    %v1525 = vadd.f32 %v1493, %v1435
    %v1526 = vadd.f32 %v1494, %v1438
    %v1527 = vadd.f32 %v1495, %v1441
    %v1528 = vadd.f32 %v1496, %v1444
    %v1529 = vadd.f32 %v1497, %v1447
    %v1530 = vadd.f32 %v1498, %v1450
    %v1531 = vadd.f32 %v1499, %v1453
    %v1532 = vadd.f32 %v1500, %v1456
    %v1533 = vadd.f32 %v1501, %v1459
    %v1534 = vadd.f32 %v1502, %v1462
    %v1535 = vadd.f32 %v1503, %v1465
    %v1536 = vadd.f32 %v1504, %v1468
    %v1537 = vadd.f32 %v1505, %v1471
    %v1538 = vadd.f32 %v1506, %v1474
    %v1539 = vld [vmem:[#allocation2] sm:$0x3]
    %v1540 = vadd.f32 %v1507, %v1508
    %v1541 = vadd.f32 %v1540, %v1509
    %v1542 = vadd.f32 %v1541, %v1510
    %v1543 = vadd.f32 %v1542, %v1511
    %v1544 = vadd.f32 %v1543, %v1512
    %v1545 = vadd.f32 %v1544, %v1513
    %v1546 = vadd.f32 %v1545, %v1514
    %v1547 = vadd.f32 %v1546, %v1515
    %v1548 = vadd.f32 %v1547, %v1516
    %v1549 = vadd.f32 %v1548, %v1517
    %v1550 = vadd.f32 %v1549, %v1518
    %v1551 = vadd.f32 %v1550, %v1519
    %v1552 = vadd.f32 %v1551, %v1520
    %v1553 = vadd.f32 %v1552, %v1521
    %v1554 = vadd.f32 %v1553, %v1522
    %v1555 = vrot.slane %v1554, 4
    %v1556 = vadd.f32 %v1554, %v1555
    %v1557 = vrot.slane %v1556, 2
    %v1558 = vadd.f32 %v1556, %v1557
    %v1559 = vrot.slane %v1558, 1
    %v1560 = vadd.f32 %v1558, %v1559
    %v1561 = vadd.f32 %v1523, %v1524
    %v1562 = vadd.f32 %v1561, %v1525
    %v1563 = vadd.f32 %v1562, %v1526
    %v1564 = vadd.f32 %v1563, %v1527
    %v1565 = vadd.f32 %v1564, %v1528
    %v1566 = vadd.f32 %v1565, %v1529
    %v1567 = vadd.f32 %v1566, %v1530
    %v1568 = vadd.f32 %v1567, %v1531
    %v1569 = vadd.f32 %v1568, %v1532
    %v1570 = vadd.f32 %v1569, %v1533
    %v1571 = vadd.f32 %v1570, %v1534
    %v1572 = vadd.f32 %v1571, %v1535
    %v1573 = vadd.f32 %v1572, %v1536
    %v1574 = vadd.f32 %v1573, %v1537
    %v1575 = vadd.f32 %v1574, %v1538
    %v1576 = vrot.slane %v1575, 4
    %v1577 = vadd.f32 %v1575, %v1576
    %v1578 = vrot.slane %v1577, 2
    %v1579 = vadd.f32 %v1577, %v1578
    %v1580 = vrot.slane %v1579, 1
    %v1581 = vadd.f32 %v1579, %v1580
    %v1584 = vsel %vm891, %v1581, %v1560
    %v1586 = vadd.f32 %v1539, %v1584
    %1587 = vst [vmem:[#allocation2] sm:$0x3] %v1586
    // Predicated region
    $region26: #{googlenet_trip_mean_forward.1} parent=1 // pred_check
      %p1588 = pneg %p22
    $region27: #{googlenet_trip_mean_forward.1} parent=1 // pred_check_branch
      %1590 = sbr.rel (%p1588) target = $region29
    $region28: #{googlenet_trip_mean_forward.1} parent=1 // pred_region
      %v1591 = vld [vmem:[#allocation2] sm:$0x3]
      %v1592 = vmul.f32 %v1591, 0.0013020834
      %v1593 = vpack.c.bf16 %v1592, %v1592
      %v1594 = vld [vmem:[%s3] sm:$0xf]
      %v1595 = vld [vmem:[%s3 + $0x4] sm:$0xf]
      %v1596 = vld [vmem:[%s3 + $0x8] sm:$0xf]
      %v1597 = vld [vmem:[%s3 + $0xc] sm:$0xf]
      %v1598 = vld [vmem:[%s3 + $0x10] sm:$0xf]
      %v1599 = vld [vmem:[%s3 + $0x14] sm:$0xf]
      %v1600 = vld [vmem:[%s3 + $0x18] sm:$0xf]
      %v1601 = vld [vmem:[%s3 + $0x1c] sm:$0xf]
      %v1602 = vld [vmem:[%s3 + $0x20] sm:$0xf]
      %v1603 = vld [vmem:[%s3 + $0x24] sm:$0xf]
      %v1604 = vld [vmem:[%s3 + $0x28] sm:$0xf]
      %v1605 = vld [vmem:[%s3 + $0x2c] sm:$0xf]
      %v1606 = vld [vmem:[%s3 + $0x30] sm:$0xf]
      %v1607 = vld [vmem:[%s3 + $0x34] sm:$0xf]
      %v1608 = vld [vmem:[%s3 + $0x38] sm:$0xf]
      %v1609 = vld [vmem:[%s3 + $0x3c] sm:$0xf]
      %v1610 = vld [vmem:[%s4] sm:$0x1]
      %v1612 = vlaneseq
      %v1613 = vshrl.u32 %v1612, 7
      %v1614 = vsub.s32 0, %v1613
      %v1615 = vrot.slane %v1610, %v1614
      %v1633 = vunpack.c.l.b16 %v1594
      %v1634 = vunpack.c.l.b16 %v1595
      %v1635 = vunpack.c.l.b16 %v1596
      %v1636 = vunpack.c.l.b16 %v1597
      %v1637 = vunpack.c.l.b16 %v1598
      %v1638 = vunpack.c.l.b16 %v1599
      %v1639 = vunpack.c.l.b16 %v1600
      %v1640 = vunpack.c.l.b16 %v1601
      %v1641 = vunpack.c.l.b16 %v1602
      %v1642 = vunpack.c.l.b16 %v1603
      %v1643 = vunpack.c.l.b16 %v1604
      %v1644 = vunpack.c.l.b16 %v1605
      %v1645 = vunpack.c.l.b16 %v1606
      %v1646 = vunpack.c.l.b16 %v1607
      %v1647 = vunpack.c.l.b16 %v1608
      %v1648 = vunpack.c.l.b16 %v1609
      %v1649 = vpack.c.b16 %v1634, %v1633
      %v1650 = vpack.c.b16 %v1636, %v1635
      %v1651 = vpack.c.b16 %v1638, %v1637
      %v1652 = vpack.c.b16 %v1640, %v1639
      %v1653 = vpack.c.b16 %v1642, %v1641
      %v1654 = vpack.c.b16 %v1644, %v1643
      %v1655 = vpack.c.b16 %v1646, %v1645
      %v1656 = vpack.c.b16 %v1648, %v1647
      %1665 = vmatprep.subr.bf16.mxu0 0
      %1666 = vmatpush1.bf16.msra.mxu0 %v1656
      %1667 = vmatprep.subr.bf16.mxu0 0
      %1668 = vmatpush1.bf16.msra.mxu0 %v1655
      %1669 = vmatprep.subr.bf16.mxu0 0
      %1670 = vmatpush1.bf16.msra.mxu0 %v1654
      %1671 = vmatprep.subr.bf16.mxu0 0
      %1672 = vmatpush1.bf16.msra.mxu0 %v1653
      %1673 = vmatprep.subr.bf16.mxu0 0
      %1674 = vmatpush1.bf16.msra.mxu0 %v1652
      %1675 = vmatprep.subr.bf16.mxu0 0
      %1676 = vmatpush1.bf16.msra.mxu0 %v1651
      %1677 = vmatprep.subr.bf16.mxu0 0
      %1678 = vmatpush1.bf16.msra.mxu0 %v1650
      %1679 = vmatprep.subr.bf16.mxu0 0
      %1680 = vmatpush1.bf16.msra.mxu0 %v1649
      %1681 = vmatprep.subr.bf16.mxu0 0
      %1682 = vmatpush2.bf16.msra.mxu0 0
      %1683 = vmatprep.subr.bf16.mxu0 0
      %1684 = vmatpush2.bf16.msra.mxu0 0
      %1685 = vmatprep.subr.bf16.mxu0 0
      %1686 = vmatpush2.bf16.msra.mxu0 0
      %1687 = vmatprep.subr.bf16.mxu0 0
      %1688 = vmatpush2.bf16.msra.mxu0 0
      %1689 = vmatprep.subr.bf16.mxu0 0
      %1690 = vmatpush2.bf16.msra.mxu0 0
      %1691 = vmatprep.subr.bf16.mxu0 0
      %1692 = vmatpush2.bf16.msra.mxu0 0
      %1693 = vmatprep.subr.bf16.mxu0 0
      %1694 = vmatpush2.bf16.msra.mxu0 0
      %1695 = vmatprep.subr.bf16.mxu0 0
      %1696 = vmatpush2.bf16.msra.mxu0 0
      %1697 = vmatprep.mubr.bf16.mxu0 0
      %1698 = vmatmul.mubr.bf16.gmra.mxu0 %v1593
      %v1699 = vpop.f32.mrf.mxu0
      %v1700 = vadd.f32 %v1615, %v1699
      %v1701 = vpop.f32.mrf.mxu0
      %v1702 = vpop.f32.mrf.mxu0
      %v1703 = vpop.f32.mrf.mxu0
      %1704 = vdwg.mxu0
      %1705 = vst [vmem:[#allocation3] sm:$0x3] %v1700
    $region29: #{googlenet_trip_mean_forward.1} parent=1 // pred_fallthru
      _
    // Predicated region
    $region30: #{googlenet_trip_mean_forward.1} parent=1 // pred_check
      _
    $region31: #{googlenet_trip_mean_forward.1} parent=1 // pred_check_branch
      %1707 = sbr.rel (0) target = $region33
    $region32: #{googlenet_trip_mean_forward.1} parent=1 // pred_region
      %s1709 = ssub.s32 32, 32
      %1710 = vsyncadd [#allocation4], %s1709
      %s1712 = sshll.u32 [#allocation3], 4
      %s1713 = int_to_ptr.vmem [resolvable:$true] %s1712
      %1715 = dma.vmem_to_hbm [thread:$0]  %s1713, 32, %s5, [#allocation4]
    $region33: #{googlenet_trip_mean_forward.1} parent=1 // pred_fallthru
      _
    // Predicated region
    $region34: #{googlenet_trip_mean_forward.1} parent=1 // pred_check
      _
    $region35: #{googlenet_trip_mean_forward.1} parent=1 // pred_check_branch
      %1717 = sbr.rel (0) target = $region37
    $region36: #{googlenet_trip_mean_forward.1} parent=1 // pred_region
      %1718 = dma.done [#allocation4], 32
    $region37: #{googlenet_trip_mean_forward.1} parent=1 // pred_fallthru
      _
    %1719 = vsyncpa [#allocation4], 1

</llo_original>
